<compile_context>
chip_gen: v7x
topology: tpu7x:2x2x1
jax: 0.10.0
libtpu: 0.0.40
codegen_flags: <defaults>
</compile_context>

<pallas_src>
import functools

import jax
import jax.numpy as jnp
from jax.experimental import pallas as pl
from jax.experimental.pallas import tpu as pltpu

HIDDEN = 2048  # hard-coded in the PyTorch module


def _round_up(x, n):
    return ((x + n - 1) // n) * n


def _cdiv(a, b):
    return (a + b - 1) // b


def _vmem_budget_bytes():
    """Per-TensorCore VMEM budget with headroom for Mosaic internal scratch.

    v5e/v6e: 128 MiB physical -> ~112 MiB budget; v7x: 64 MiB -> ~56 MiB.
    Falls back to a conservative 56 MiB if the query is unavailable.
    """
    cap = None
    try:
        info = pltpu.get_tpu_info()
        cap = getattr(info, "vmem_capacity_bytes", None)
    except Exception:  # pragma: no cover - query not available
        cap = None
    if not cap:
        cap = 64 * 1024 * 1024
    return int(cap) * 7 // 8


# ----------------------------------------------------------------------------
# Kernels
# ----------------------------------------------------------------------------
def _ffn_resident_kernel(x_ref, w1_ref, b1_ref, w2_ref, b2_ref, o_ref):
    # x_ref:  (tm, d_pad)          -- already in the weight/compute dtype
    # w1_ref: (d_pad, HIDDEN)      -- resident (constant index_map)
    # b1_ref: (1, HIDDEN)
    # w2_ref: (HIDDEN, d_pad)      -- resident
    # b2_ref: (1, d_pad)
    # o_ref:  (tm, d_pad)
    h = jnp.dot(x_ref[...], w1_ref[...], preferred_element_type=jnp.float32)
    h = jnp.maximum(h + b1_ref[...].astype(jnp.float32), 0.0)
    out = jnp.dot(h.astype(w2_ref.dtype), w2_ref[...],
                  preferred_element_type=jnp.float32)
    o_ref[...] = (out + b2_ref[...].astype(jnp.float32)).astype(o_ref.dtype)


def _ffn_chunked_kernel(x_ref, w1_ref, b1_ref, w2_ref, b2_ref, o_ref, acc_ref,
                        *, th):
    # Fallback for very large d_model (weights do not fit VMEM).
    # x_ref:  (tm, d_pad)
    # w1_ref: (d_pad, th)       -- hidden chunk h
    # b1_ref: (1, HIDDEN)       -- full bias, resident; sliced per chunk below
    # w2_ref: (th, d_pad)       -- hidden chunk h
    # b2_ref: (1, d_pad)
    # acc_ref:(tm, d_pad) f32 scratch
    h_idx = pl.program_id(1)

    @pl.when(h_idx == 0)
    def _():
        acc_ref[...] = jnp.zeros_like(acc_ref)

    start = pl.multiple_of(h_idx * th, th)
    b1_chunk = b1_ref[:, pl.ds(start, th)].astype(jnp.float32)

    h = jnp.dot(x_ref[...], w1_ref[...], preferred_element_type=jnp.float32)
    h = jnp.maximum(h + b1_chunk, 0.0)
    acc_ref[...] += jnp.dot(h.astype(w2_ref.dtype), w2_ref[...],
                            preferred_element_type=jnp.float32)

    @pl.when(h_idx == pl.num_programs(1) - 1)
    def _():
        o_ref[...] = (acc_ref[...] + b2_ref[...].astype(jnp.float32)
                      ).astype(o_ref.dtype)


# ----------------------------------------------------------------------------
# Wrapper
# ----------------------------------------------------------------------------
@functools.partial(jax.jit, static_argnames=("tm", "th"))
def point_wise_feed_forward(x, w1, b1, w2, b2, *, tm=512, th=512):
    """x: (batch, seq_len, d_model) -> (batch, seq_len, d_model).

    Weights are stored as (in_features, out_features), i.e. transposed relative
    to PyTorch's nn.Linear (out, in) layout.  Pass bf16 weights on v6e/v7x for
    the fast MXU path; x is cast once to the weight dtype and accumulation is
    always f32 (so an f32 x / bf16 weight call computes in bf16 on the MXU).
    """
    batch, seq_len, d_model = x.shape
    assert w1.shape == (d_model, HIDDEN) and w2.shape == (HIDDEN, d_model)
    assert b1.shape == (HIDDEN,) and b2.shape == (d_model,)
    assert HIDDEN % th == 0 and th % 128 == 0, "th must divide 2048, mult of 128"

    out_dtype = x.dtype
    cdtype = w1.dtype                      # MXU compute dtype
    act_bytes = jnp.dtype(cdtype).itemsize
    out_bytes = jnp.dtype(out_dtype).itemsize
    w_bytes = jnp.dtype(w1.dtype).itemsize

    m = batch * seq_len
    # Lane-dense d_model: pad to a multiple of 128 (MXU-aligned, unmasked vst).
    d_pad = max(_round_up(d_model, 128), 128)

    # Row tile: large, but ensure >= 2 row tiles when possible so the
    # "parallel" axis can shard across both TensorCores on v7x.
    tm_eff = min(tm, _round_up(m, 8))
    if m > 8:
        tm_eff = min(tm_eff, _round_up(_cdiv(m, 2), 8))
    m_pad = _round_up(m, tm_eff)

    # Pad / cast operands once in the wrapper (cast happens once, not per step).
    x2d = x.reshape(m, d_model).astype(cdtype)
    x2d = jnp.pad(x2d, ((0, m_pad - m), (0, d_pad - d_model)))
    w1p = jnp.pad(w1, ((0, d_pad - d_model), (0, 0)))
    w2p = jnp.pad(w2, ((0, 0), (0, d_pad - d_model)))
    b1r = b1.reshape(1, HIDDEN)
    b2r = jnp.pad(b2.reshape(1, d_model), ((0, 0), (0, d_pad - d_model)))

    budget = _vmem_budget_bytes()
    n_row = m_pad // tm_eff
    flops = 4 * m_pad * d_pad * HIDDEN       # two matmuls, 2 flops/MAC

    # Working-set estimate for the resident-weights path (conservative: 2x on
    # every BlockSpec operand for double-buffering, plus f32 intermediates and
    # the implicit bf16 copy of h).
    resident_est = (
        2 * tm_eff * d_pad * act_bytes                 # x tiles
        + 2 * tm_eff * d_pad * out_bytes               # out tiles
        + 2 * d_pad * HIDDEN * w_bytes                 # W1 (resident)
        + 2 * HIDDEN * d_pad * w_bytes                 # W2 (resident)
        + 2 * (HIDDEN + d_pad) * w_bytes               # biases
        + tm_eff * HIDDEN * 4                          # f32 h
        + tm_eff * HIDDEN * act_bytes                  # cast copy of h
        + tm_eff * d_pad * 4)                          # f32 out
    use_resident = resident_est <= budget

    if use_resident:
        # ------------------ resident-weights path (preferred) ----------------
        bytes_accessed = (m_pad * d_pad * act_bytes
                          + m_pad * d_pad * out_bytes
                          + (w1p.size + w2p.size + b1r.size + b2r.size) * w_bytes)
        cost = pl.CostEstimate(flops=flops, transcendentals=0,
                               bytes_accessed=int(bytes_accessed))
        vmem_limit = int(min(budget, max(2 * resident_est, 32 * 1024 * 1024)))

        out2d = pl.pallas_call(
            _ffn_resident_kernel,
            out_shape=jax.ShapeDtypeStruct((m_pad, d_pad), out_dtype),
            grid_spec=pltpu.PrefetchScalarGridSpec(
                num_scalar_prefetch=0,
                grid=(n_row,),
                in_specs=[
                    pl.BlockSpec((tm_eff, d_pad), lambda i: (i, 0)),    # x tile
                    pl.BlockSpec((d_pad, HIDDEN), lambda i: (0, 0)),    # W1 (resident)
                    pl.BlockSpec((1, HIDDEN), lambda i: (0, 0)),        # b1
                    pl.BlockSpec((HIDDEN, d_pad), lambda i: (0, 0)),    # W2 (resident)
                    pl.BlockSpec((1, d_pad), lambda i: (0, 0)),         # b2
                ],
                out_specs=pl.BlockSpec((tm_eff, d_pad), lambda i: (i, 0)),
            ),
            compiler_params=pltpu.CompilerParams(
                dimension_semantics=("parallel",),
                vmem_limit_bytes=vmem_limit,
            ),
            cost_estimate=cost,
        )(x2d, w1p, b1r, w2p, b2r)
    else:
        # --------- hidden-chunk fallback (only for very large d_model) -------
        chunked_est = (
            2 * tm_eff * d_pad * act_bytes             # x tiles
            + 2 * tm_eff * d_pad * out_bytes           # out tiles
            + 2 * d_pad * th * w_bytes                 # W1 chunk (dbl-buffered)
            + 2 * th * d_pad * w_bytes                 # W2 chunk
            + 2 * (HIDDEN + d_pad) * w_bytes           # biases
            + tm_eff * d_pad * 4                       # f32 accumulator
            + tm_eff * th * 4                          # f32 h chunk
            + tm_eff * th * act_bytes)                 # cast copy of h chunk
        vmem_limit = int(min(budget, max(2 * chunked_est, 32 * 1024 * 1024)))
        # Weights are re-streamed once per row tile under this grid.
        bytes_accessed = (m_pad * d_pad * act_bytes
                          + m_pad * d_pad * out_bytes
                          + n_row * (w1p.size + w2p.size) * w_bytes
                          + (b1r.size + b2r.size) * w_bytes)
        cost = pl.CostEstimate(flops=flops, transcendentals=0,
                               bytes_accessed=int(bytes_accessed))

        out2d = pl.pallas_call(
            functools.partial(_ffn_chunked_kernel, th=th),
            out_shape=jax.ShapeDtypeStruct((m_pad, d_pad), out_dtype),
            grid_spec=pltpu.PrefetchScalarGridSpec(
                num_scalar_prefetch=0,
                grid=(n_row, HIDDEN // th),
                in_specs=[
                    pl.BlockSpec((tm_eff, d_pad), lambda i, h: (i, 0)),  # x tile
                    pl.BlockSpec((d_pad, th), lambda i, h: (0, h)),      # W1 chunk
                    pl.BlockSpec((1, HIDDEN), lambda i, h: (0, 0)),      # full b1
                    pl.BlockSpec((th, d_pad), lambda i, h: (h, 0)),      # W2 chunk
                    pl.BlockSpec((1, d_pad), lambda i, h: (0, 0)),       # b2
                ],
                out_specs=pl.BlockSpec((tm_eff, d_pad), lambda i, h: (i, 0)),
                scratch_shapes=[pltpu.VMEM((tm_eff, d_pad), jnp.float32)],
            ),
            compiler_params=pltpu.CompilerParams(
                dimension_semantics=("parallel", "arbitrary"),
                vmem_limit_bytes=vmem_limit,
            ),
            cost_estimate=cost,
        )(x2d, w1p, b1r, w2p, b2r)

    out2d = out2d[:m, :d_model]
    return out2d.reshape(batch, seq_len, d_model)


def init_params(key, d_model, dtype=jnp.float32):
    """Deterministic synthetic params (shapes match nn.Linear(d_model,2048)/(2048,d_model))."""
    k1, k2, k3, k4 = jax.random.split(key, 4)
    # Stored as (in, out) — transposed vs. PyTorch's (out, in).
    w1 = jax.random.normal(k1, (d_model, HIDDEN), dtype) * (1.0 / jnp.sqrt(d_model))
    b1 = jax.random.normal(k2, (HIDDEN,), dtype) * 0.01
    w2 = jax.random.normal(k3, (HIDDEN, d_model), dtype) * (1.0 / jnp.sqrt(HIDDEN))
    b2 = jax.random.normal(k4, (d_model,), dtype) * 0.01
    return w1, b1, w2, b2


if __name__ == "__main__":
    key = jax.random.PRNGKey(0)
    batch, seq_len, d_model = 2, 8, 32

    kx, kp = jax.random.split(key)
    x = jax.random.normal(kx, (batch, seq_len, d_model), jnp.float32)
    w1, b1, w2, b2 = init_params(kp, d_model)

    out = point_wise_feed_forward(x, w1, b1, w2, b2)
    out = jax.block_until_ready(out)

    # Pure-JAX reference of the same math (f32 params → f32 path in kernel).
    ref = jnp.maximum(x @ w1 + b1, 0.0) @ w2 + b2
    assert out.shape == (batch, seq_len, d_model)
    assert jnp.allclose(out, ref, atol=2e-3, rtol=2e-3), \
        float(jnp.max(jnp.abs(out - ref)))

    # NOTE: on v6e/v7x, pass bf16 weights for the fast MXU path; x is cast to
    # the weight dtype once in the wrapper, accumulation stays f32.
    print("KERNEL_OK")
</pallas_src>

<mosaic_0001>
module attributes {stable_mosaic.version = 11 : i64} {
  func.func @_ffn_resident_kernel(%arg0: i32, %arg1: memref<8x128xf32, #tpu.memory_space<vmem>>, %arg2: memref<128x2048xf32, #tpu.memory_space<vmem>>, %arg3: memref<1x2048xf32, #tpu.memory_space<vmem>>, %arg4: memref<2048x128xf32, #tpu.memory_space<vmem>>, %arg5: memref<1x128xf32, #tpu.memory_space<vmem>>, %arg6: memref<8x128xf32, #tpu.memory_space<vmem>>) attributes {dimension_semantics = [#tpu.dimension_semantics<parallel>], iteration_bounds = array<i64: 2>, scalar_prefetch = 0 : i64, scratch_operands = 0 : i64, tpu.core_type = #tpu.core_type<tc>, window_params = [{transform_indices = @transform_0, window_bounds = array<i64: 8, 128>}, {pipeline_mode = #tpu.pipeline_mode<synchronous>, transform_indices = @transform_1, window_bounds = array<i64: 128, 2048>}, {pipeline_mode = #tpu.pipeline_mode<synchronous>, transform_indices = @transform_2, window_bounds = array<i64: 1, 2048>}, {pipeline_mode = #tpu.pipeline_mode<synchronous>, transform_indices = @transform_3, window_bounds = array<i64: 2048, 128>}, {pipeline_mode = #tpu.pipeline_mode<synchronous>, transform_indices = @transform_4, window_bounds = array<i64: 1, 128>}, {transform_indices = @transform_5, window_bounds = array<i64: 8, 128>}]} {
    %c0 = arith.constant 0 : index
    %c0_0 = arith.constant 0 : index
    %0 = vector.load %arg1[%c0, %c0_0] : memref<8x128xf32, #tpu.memory_space<vmem>>, vector<8x128xf32>
    %c0_1 = arith.constant 0 : index
    %c0_2 = arith.constant 0 : index
    %1 = vector.load %arg2[%c0_1, %c0_2] : memref<128x2048xf32, #tpu.memory_space<vmem>>, vector<128x2048xf32>
    %cst = arith.constant dense<0.000000e+00> : vector<8x2048xf32>
    %2 = tpu.matmul %0, %1, %cst {dimension_numbers = #tpu.dot_dimension_numbers<[1], [0], [0], [1], [0, 0, 1, 1], [], []>} : vector<8x128xf32>, vector<128x2048xf32>, vector<8x2048xf32> -> vector<8x2048xf32>
    %c0_3 = arith.constant 0 : index
    %c0_4 = arith.constant 0 : index
    %3 = vector.load %arg3[%c0_3, %c0_4] : memref<1x2048xf32, #tpu.memory_space<vmem>>, vector<1x2048xf32>
    %4 = vector.broadcast %3 : vector<1x2048xf32> to vector<8x2048xf32>
    %5 = arith.addf %2, %4 : vector<8x2048xf32>
    %cst_5 = arith.constant 0.000000e+00 : f32
    %6 = vector.broadcast %cst_5 : f32 to vector<8x2048xf32>
    %7 = arith.maximumf %5, %6 : vector<8x2048xf32>
    %c0_6 = arith.constant 0 : index
    %c0_7 = arith.constant 0 : index
    %8 = vector.load %arg4[%c0_6, %c0_7] : memref<2048x128xf32, #tpu.memory_space<vmem>>, vector<2048x128xf32>
    %cst_8 = arith.constant dense<0.000000e+00> : vector<8x128xf32>
    %9 = tpu.matmul %7, %8, %cst_8 {dimension_numbers = #tpu.dot_dimension_numbers<[1], [0], [0], [1], [0, 0, 1, 1], [], []>} : vector<8x2048xf32>, vector<2048x128xf32>, vector<8x128xf32> -> vector<8x128xf32>
    %c0_9 = arith.constant 0 : index
    %c0_10 = arith.constant 0 : index
    %10 = vector.load %arg5[%c0_9, %c0_10] : memref<1x128xf32, #tpu.memory_space<vmem>>, vector<1x128xf32>
    %11 = vector.broadcast %10 : vector<1x128xf32> to vector<8x128xf32>
    %12 = arith.addf %9, %11 : vector<8x128xf32>
    %c0_11 = arith.constant 0 : index
    %c0_12 = arith.constant 0 : index
    %13 = vector.load %arg6[%c0_11, %c0_12] : memref<8x128xf32, #tpu.memory_space<vmem>>, vector<8x128xf32>
    tpu.vector_store %arg6[%c0_11, %c0_12], %12 {strides = array<i32>} : memref<8x128xf32, #tpu.memory_space<vmem>>, vector<8x128xf32>,
    return
  }
  func.func @transform_0(%arg0: i32) -> (i32, i32) {
    %c0_i32 = arith.constant 0 : i32
    %c0_i32_0 = arith.constant 0 : i32
    return %arg0, %c0_i32 : i32, i32
  }
  func.func @transform_1(%arg0: i32) -> (i32, i32) {
    %c0_i32 = arith.constant 0 : i32
    %c0_i32_0 = arith.constant 0 : i32
    %c0_i32_1 = arith.constant 0 : i32
    return %c0_i32, %c0_i32_0 : i32, i32
  }
  func.func @transform_2(%arg0: i32) -> (i32, i32) {
    %c0_i32 = arith.constant 0 : i32
    %c0_i32_0 = arith.constant 0 : i32
    %c0_i32_1 = arith.constant 0 : i32
    return %c0_i32, %c0_i32_0 : i32, i32
  }
  func.func @transform_3(%arg0: i32) -> (i32, i32) {
    %c0_i32 = arith.constant 0 : i32
    %c0_i32_0 = arith.constant 0 : i32
    %c0_i32_1 = arith.constant 0 : i32
    return %c0_i32, %c0_i32_0 : i32, i32
  }
  func.func @transform_4(%arg0: i32) -> (i32, i32) {
    %c0_i32 = arith.constant 0 : i32
    %c0_i32_0 = arith.constant 0 : i32
    %c0_i32_1 = arith.constant 0 : i32
    return %c0_i32, %c0_i32_0 : i32, i32
  }
  func.func @transform_5(%arg0: i32) -> (i32, i32) {
    %c0_i32 = arith.constant 0 : i32
    %c0_i32_0 = arith.constant 0 : i32
    return %arg0, %c0_i32 : i32, i32
  }
}

</mosaic_0001>

<llo_original>
// kernel: point_wise_feed_forward.1
$region0: #{point_wise_feed_forward.1}
  #allocation0 [shape = 'u32[]', space=smem, size = 0x4, offset = 0x4, fixed_abs, tag = 'smem constant byte address 0x4 - core index']
  #allocation1 [shape = 'u32[144,128]{1,0:T(1,128)}', space=vmem, size = 0x12000, scoped, tag = 'internal scratch']
  %s0 = inlined_call_operand.vmem [shape: f32[16,128], index: 0, kind: input, shape index: {}]
  %s1 = inlined_call_operand.vmem [shape: f32[128,2048], index: 1, kind: input, shape index: {}]
  %s2 = inlined_call_operand.vmem [shape: f32[1,2048], index: 2, kind: input, shape index: {}]
  %s3 = inlined_call_operand.vmem [shape: f32[2048,128], index: 3, kind: input, shape index: {}]
  %s4 = inlined_call_operand.vmem [shape: f32[1,128], index: 4, kind: input, shape index: {}]
  %s5 = inlined_call_operand.vmem [shape: f32[16,128], index: 5, kind: output, shape index: {}]
  %s6 = sld [smem:[#allocation0]]
  $region53: #{point_wise_feed_forward.1} parent=0
    _
  %s8 = ssub.s32 1, %s6
  %s9 = scalar_select 0, %s8, %s6
  loop: start=0, step=1, limit=4
  $region2: #{point_wise_feed_forward.1} parent=0 // loop_pre_header
    _
  $region3: #{point_wise_feed_forward.1} parent=0 // loop_header
    %s11 = sphi 0, %s15
    %p12 = scmp.ge.s32.totalorder %s11, 4
    %s21 = sphi 0, %s23
    %s24 = sphi 0, %s21
    %s25 = sphi 0, %s24
    %s41 = sphi 0, %s25
    %s45 = sphi 0, %s45
    %s47 = sphi 0, %s45
    %s48 = sphi 0, %s47
    %s62 = sphi 0, %s48
    %s66 = sphi 0, %s66
    %s68 = sphi 0, %s66
    %s69 = sphi 0, %s68
    %s83 = sphi 0, %s69
    %s87 = sphi 0, %s87
    %s89 = sphi 0, %s87
    %s90 = sphi 0, %s89
    %s104 = sphi 0, %s90
    %s108 = sphi 0, %s108
    %s110 = sphi 0, %s108
    %s111 = sphi 0, %s110
    %s125 = sphi 0, %s111
    %s131 = sphi 0, %s133
    %s134 = sphi 0, %s131
    %s135 = sphi 0, %s134
    %s151 = sphi 0, %s135
  $region4: #{point_wise_feed_forward.1} parent=0 // loop_header_branch
    %14 = sbr.rel (%p12) target = $region8
  $region5: #{point_wise_feed_forward.1} parent=0 // loop_body
    %s16 = ssub.s32 %s11, 1
    %s17 = ssub.s32 %s11, 2
    %s18 = sadd.s32 %s11, 1
    %s19 = ssub.s32 %s11, %s18
    %p20 = scmp.eq.s32.totalorder %s19, 0
    %s22 = sadd.s32 %s21, 1
    %s23 = scalar_select %p20, %s21, %s22
    %p26 = pneg %p20
    %p27 = scmp.eq.s32.totalorder %s11, 1
    %p28 = por %p26, %p27
    %p29 = scmp.ne.s32.totalorder %s21, %s24
    %p30 = scmp.eq.s32.totalorder %s11, 0
    %p31 = por %p29, %p30
    %p32 = scmp.ne.s32.totalorder %s21, %s24
    %p33 = scmp.eq.s32.totalorder %s16, 1
    %p34 = por %p32, %p33
    %p35 = scmp.ne.s32.totalorder %s24, %s25
    %p36 = scmp.eq.s32.totalorder %s16, 0
    %p37 = por %p35, %p36
    %p38 = scmp.ne.s32.totalorder %s24, %s25
    %p39 = scmp.eq.s32.totalorder %s17, 1
    %p40 = por %p38, %p39
    %p42 = scmp.ne.s32.totalorder %s25, %s41
    %p43 = scmp.eq.s32.totalorder %s17, 0
    %p44 = por %p42, %p43
    %s46 = sadd.s32 %s45, 1
    %p49 = scmp.eq.s32.totalorder %s11, 1
    %p50 = scmp.ne.s32.totalorder %s45, %s47
    %p51 = scmp.eq.s32.totalorder %s11, 0
    %p52 = por %p50, %p51
    %p53 = scmp.ne.s32.totalorder %s45, %s47
    %p54 = scmp.eq.s32.totalorder %s16, 1
    %p55 = por %p53, %p54
    %p56 = scmp.ne.s32.totalorder %s47, %s48
    %p57 = scmp.eq.s32.totalorder %s16, 0
    %p58 = por %p56, %p57
    %p59 = scmp.ne.s32.totalorder %s47, %s48
    %p60 = scmp.eq.s32.totalorder %s17, 1
    %p61 = por %p59, %p60
    %p63 = scmp.ne.s32.totalorder %s48, %s62
    %p64 = scmp.eq.s32.totalorder %s17, 0
    %p65 = por %p63, %p64
    %s67 = sadd.s32 %s66, 1
    %p70 = scmp.eq.s32.totalorder %s11, 1
    %p71 = scmp.ne.s32.totalorder %s66, %s68
    %p72 = scmp.eq.s32.totalorder %s11, 0
    %p73 = por %p71, %p72
    %p74 = scmp.ne.s32.totalorder %s66, %s68
    %p75 = scmp.eq.s32.totalorder %s16, 1
    %p76 = por %p74, %p75
    %p77 = scmp.ne.s32.totalorder %s68, %s69
    %p78 = scmp.eq.s32.totalorder %s16, 0
    %p79 = por %p77, %p78
    %p80 = scmp.ne.s32.totalorder %s68, %s69
    %p81 = scmp.eq.s32.totalorder %s17, 1
    %p82 = por %p80, %p81
    %p84 = scmp.ne.s32.totalorder %s69, %s83
    %p85 = scmp.eq.s32.totalorder %s17, 0
    %p86 = por %p84, %p85
    %s88 = sadd.s32 %s87, 1
    %p91 = scmp.eq.s32.totalorder %s11, 1
    %p92 = scmp.ne.s32.totalorder %s87, %s89
    %p93 = scmp.eq.s32.totalorder %s11, 0
    %p94 = por %p92, %p93
    %p95 = scmp.ne.s32.totalorder %s87, %s89
    %p96 = scmp.eq.s32.totalorder %s16, 1
    %p97 = por %p95, %p96
    %p98 = scmp.ne.s32.totalorder %s89, %s90
    %p99 = scmp.eq.s32.totalorder %s16, 0
    %p100 = por %p98, %p99
    %p101 = scmp.ne.s32.totalorder %s89, %s90
    %p102 = scmp.eq.s32.totalorder %s17, 1
    %p103 = por %p101, %p102
    %p105 = scmp.ne.s32.totalorder %s90, %s104
    %p106 = scmp.eq.s32.totalorder %s17, 0
    %p107 = por %p105, %p106
    %s109 = sadd.s32 %s108, 1
    %p112 = scmp.eq.s32.totalorder %s11, 1
    %p113 = scmp.ne.s32.totalorder %s108, %s110
    %p114 = scmp.eq.s32.totalorder %s11, 0
    %p115 = por %p113, %p114
    %p116 = scmp.ne.s32.totalorder %s108, %s110
    %p117 = scmp.eq.s32.totalorder %s16, 1
    %p118 = por %p116, %p117
    %p119 = scmp.ne.s32.totalorder %s110, %s111
    %p120 = scmp.eq.s32.totalorder %s16, 0
    %p121 = por %p119, %p120
    %p122 = scmp.ne.s32.totalorder %s110, %s111
    %p123 = scmp.eq.s32.totalorder %s17, 1
    %p124 = por %p122, %p123
    %p126 = scmp.ne.s32.totalorder %s111, %s125
    %p127 = scmp.eq.s32.totalorder %s17, 0
    %p128 = por %p126, %p127
    %s129 = ssub.s32 %s11, %s18
    %p130 = scmp.eq.s32.totalorder %s129, 0
    %s132 = sadd.s32 %s131, 1
    %s133 = scalar_select %p130, %s131, %s132
    %p136 = pneg %p130
    %p137 = scmp.eq.s32.totalorder %s11, 1
    %p138 = por %p136, %p137
    %p139 = scmp.ne.s32.totalorder %s131, %s134
    %p140 = scmp.eq.s32.totalorder %s11, 0
    %p141 = por %p139, %p140
    %p142 = scmp.ne.s32.totalorder %s131, %s134
    %p143 = scmp.eq.s32.totalorder %s16, 1
    %p144 = por %p142, %p143
    %p145 = scmp.ne.s32.totalorder %s134, %s135
    %p146 = scmp.eq.s32.totalorder %s16, 0
    %p147 = por %p145, %p146
    %p148 = scmp.ne.s32.totalorder %s134, %s135
    %p149 = scmp.eq.s32.totalorder %s17, 1
    %p150 = por %p148, %p149
    %p152 = scmp.ne.s32.totalorder %s135, %s151
    %p153 = scmp.eq.s32.totalorder %s17, 0
    %p154 = por %p152, %p153
    %p155 = scmp.le.s32.totalorder 1, %s11
    %p156 = scmp.lt.s32.totalorder %s11, 3
    %p157 = pnand %p155, %p156
    %p158 = pneg %p157
    // Predicated region
    $region9: #{point_wise_feed_forward.1} parent=5 // pred_check
      _
    $region10: #{point_wise_feed_forward.1} parent=5 // pred_check_branch
      %160 = sbr.rel (%p157) target = $region12
    $region11: #{point_wise_feed_forward.1} parent=5 // pred_region
      %s161 = ssub.s32 %s11, 1
      // Predicated region
      $region13: #{point_wise_feed_forward.1} parent=11 // pred_check
        %p162 = pneg %p58
      $region14: #{point_wise_feed_forward.1} parent=11 // pred_check_branch
        %164 = sbr.rel (%p162) target = $region16
      $region15: #{point_wise_feed_forward.1} parent=11 // pred_region
        _
      $region16: #{point_wise_feed_forward.1} parent=11 // pred_fallthru
        _
      // Predicated region
      $region17: #{point_wise_feed_forward.1} parent=11 // pred_check
        %p165 = pneg %p79
      $region18: #{point_wise_feed_forward.1} parent=11 // pred_check_branch
        %167 = sbr.rel (%p165) target = $region20
      $region19: #{point_wise_feed_forward.1} parent=11 // pred_region
        _
      $region20: #{point_wise_feed_forward.1} parent=11 // pred_fallthru
        _
      // Predicated region
      $region21: #{point_wise_feed_forward.1} parent=11 // pred_check
        %p168 = pneg %p100
      $region22: #{point_wise_feed_forward.1} parent=11 // pred_check_branch
        %170 = sbr.rel (%p168) target = $region24
      $region23: #{point_wise_feed_forward.1} parent=11 // pred_region
        _
      $region24: #{point_wise_feed_forward.1} parent=11 // pred_fallthru
        _
      // Predicated region
      $region25: #{point_wise_feed_forward.1} parent=11 // pred_check
        %p171 = pneg %p121
      $region26: #{point_wise_feed_forward.1} parent=11 // pred_check_branch
        %173 = sbr.rel (%p171) target = $region28
      $region27: #{point_wise_feed_forward.1} parent=11 // pred_region
        _
      $region28: #{point_wise_feed_forward.1} parent=11 // pred_fallthru
        _
    $region12: #{point_wise_feed_forward.1} parent=5 // pred_fallthru
      _
    %p174 = scmp.lt.s32.totalorder %s11, 2
    // Predicated region
    $region29: #{point_wise_feed_forward.1} parent=5 // pred_check
      %p175 = pneg %p174
    $region30: #{point_wise_feed_forward.1} parent=5 // pred_check_branch
      %177 = sbr.rel (%p175) target = $region32
    $region31: #{point_wise_feed_forward.1} parent=5 // pred_region
      // Predicated region
      $region33: #{point_wise_feed_forward.1} parent=31 // pred_check
        %p178 = pneg %p31
      $region34: #{point_wise_feed_forward.1} parent=31 // pred_check_branch
        %180 = sbr.rel (%p178) target = $region36
      $region35: #{point_wise_feed_forward.1} parent=31 // pred_region
        %p181 = scmp.lt.s32.totalorder %s11, 1
        %s182 = scalar_select %p181, %s11, 1
        %s183 = smul.addr %s182, 8
        %s184 = scalar_lea.vmem %s0, %s183
      $region36: #{point_wise_feed_forward.1} parent=31 // pred_fallthru
        _
    $region32: #{point_wise_feed_forward.1} parent=5 // pred_fallthru
      _
    %p185 = scmp.le.s32.totalorder 1, %s11
    %p186 = scmp.lt.s32.totalorder %s11, 3
    %p187 = pnand %p185, %p186
    %p188 = pneg %p187
    // Predicated region
    $region37: #{point_wise_feed_forward.1} parent=5 // pred_check
      _
    $region38: #{point_wise_feed_forward.1} parent=5 // pred_check_branch
      %190 = sbr.rel (%p187) target = $region40
    $region39: #{point_wise_feed_forward.1} parent=5 // pred_region
      %s191 = ssub.s32 %s11, 1
      %p192 = scmp.lt.s32.totalorder %s16, 1
      %s193 = scalar_select %p192, %s16, 1
      %s194 = smul.addr %s193, 8
      %s195 = scalar_lea.vmem %s0, %s194
      %p196 = pneg %p37
      %p197 = pneg %p34
      %p198 = pneg %p58
      %p199 = pneg %p55
      %p200 = pneg %p79
      %p201 = pneg %p76
      %p202 = pneg %p100
      %p203 = pneg %p97
      %p204 = pneg %p121
      %p205 = pneg %p118
      %p206 = pneg %p147
      %p207 = pneg %p144
      %p208 = scmp.lt.s32.totalorder %s16, 1
      %s209 = scalar_select %p208, %s16, 1
      %s210 = smul.addr %s209, 8
      %s211 = scalar_lea.vmem %s5, %s210
      %p212 = scmp.lt.s32.totalorder %s16, 1
      %s213 = scalar_select %p212, %s16, 1
      %s214 = smul.addr %s213, 8
      %s215 = scalar_lea.vmem %s0, %s214
      %p216 = scmp.lt.s32.totalorder %s16, 1
      %s217 = scalar_select %p216, %s16, 1
      %s218 = smul.addr %s217, 8
      %s219 = scalar_lea.vmem %s5, %s218
      %v220 = vld [vmem:[%s215] sm:$0xff]
      %v221 = vld [vmem:[%s1] sm:$0xff]
      %v222 = vld [vmem:[%s1 + $0x8] sm:$0xff]
      %v223 = vld [vmem:[%s1 + $0x10] sm:$0xff]
      %v224 = vld [vmem:[%s1 + $0x18] sm:$0xff]
      %v225 = vld [vmem:[%s1 + $0x20] sm:$0xff]
      %v226 = vld [vmem:[%s1 + $0x28] sm:$0xff]
      %v227 = vld [vmem:[%s1 + $0x30] sm:$0xff]
      %v228 = vld [vmem:[%s1 + $0x38] sm:$0xff]
      %v229 = vld [vmem:[%s1 + $0x40] sm:$0xff]
      %v230 = vld [vmem:[%s1 + $0x48] sm:$0xff]
      %v231 = vld [vmem:[%s1 + $0x50] sm:$0xff]
      %v232 = vld [vmem:[%s1 + $0x58] sm:$0xff]
      %v233 = vld [vmem:[%s1 + $0x60] sm:$0xff]
      %v234 = vld [vmem:[%s1 + $0x68] sm:$0xff]
      %v235 = vld [vmem:[%s1 + $0x70] sm:$0xff]
      %v236 = vld [vmem:[%s1 + $0x78] sm:$0xff]
      %v237 = vld [vmem:[%s1 + $0x80] sm:$0xff]
      %v238 = vld [vmem:[%s1 + $0x88] sm:$0xff]
      %v239 = vld [vmem:[%s1 + $0x90] sm:$0xff]
      %v240 = vld [vmem:[%s1 + $0x98] sm:$0xff]
      %v241 = vld [vmem:[%s1 + $0xa0] sm:$0xff]
      %v242 = vld [vmem:[%s1 + $0xa8] sm:$0xff]
      %v243 = vld [vmem:[%s1 + $0xb0] sm:$0xff]
      %v244 = vld [vmem:[%s1 + $0xb8] sm:$0xff]
      %v245 = vld [vmem:[%s1 + $0xc0] sm:$0xff]
      %v246 = vld [vmem:[%s1 + $0xc8] sm:$0xff]
      %v247 = vld [vmem:[%s1 + $0xd0] sm:$0xff]
      %v248 = vld [vmem:[%s1 + $0xd8] sm:$0xff]
      %v249 = vld [vmem:[%s1 + $0xe0] sm:$0xff]
      %v250 = vld [vmem:[%s1 + $0xe8] sm:$0xff]
      %v251 = vld [vmem:[%s1 + $0xf0] sm:$0xff]
      %v252 = vld [vmem:[%s1 + $0xf8] sm:$0xff]
      %v253 = vld [vmem:[%s1 + $0x100] sm:$0xff]
      %v254 = vld [vmem:[%s1 + $0x108] sm:$0xff]
      %v255 = vld [vmem:[%s1 + $0x110] sm:$0xff]
      %v256 = vld [vmem:[%s1 + $0x118] sm:$0xff]
      %v257 = vld [vmem:[%s1 + $0x120] sm:$0xff]
      %v258 = vld [vmem:[%s1 + $0x128] sm:$0xff]
      %v259 = vld [vmem:[%s1 + $0x130] sm:$0xff]
      %v260 = vld [vmem:[%s1 + $0x138] sm:$0xff]
      %v261 = vld [vmem:[%s1 + $0x140] sm:$0xff]
      %v262 = vld [vmem:[%s1 + $0x148] sm:$0xff]
      %v263 = vld [vmem:[%s1 + $0x150] sm:$0xff]
      %v264 = vld [vmem:[%s1 + $0x158] sm:$0xff]
      %v265 = vld [vmem:[%s1 + $0x160] sm:$0xff]
      %v266 = vld [vmem:[%s1 + $0x168] sm:$0xff]
      %v267 = vld [vmem:[%s1 + $0x170] sm:$0xff]
      %v268 = vld [vmem:[%s1 + $0x178] sm:$0xff]
      %v269 = vld [vmem:[%s1 + $0x180] sm:$0xff]
      %v270 = vld [vmem:[%s1 + $0x188] sm:$0xff]
      %v271 = vld [vmem:[%s1 + $0x190] sm:$0xff]
      %v272 = vld [vmem:[%s1 + $0x198] sm:$0xff]
      %v273 = vld [vmem:[%s1 + $0x1a0] sm:$0xff]
      %v274 = vld [vmem:[%s1 + $0x1a8] sm:$0xff]
      %v275 = vld [vmem:[%s1 + $0x1b0] sm:$0xff]
      %v276 = vld [vmem:[%s1 + $0x1b8] sm:$0xff]
      %v277 = vld [vmem:[%s1 + $0x1c0] sm:$0xff]
      %v278 = vld [vmem:[%s1 + $0x1c8] sm:$0xff]
      %v279 = vld [vmem:[%s1 + $0x1d0] sm:$0xff]
      %v280 = vld [vmem:[%s1 + $0x1d8] sm:$0xff]
      %v281 = vld [vmem:[%s1 + $0x1e0] sm:$0xff]
      %v282 = vld [vmem:[%s1 + $0x1e8] sm:$0xff]
      %v283 = vld [vmem:[%s1 + $0x1f0] sm:$0xff]
      %v284 = vld [vmem:[%s1 + $0x1f8] sm:$0xff]
      %v285 = vld [vmem:[%s1 + $0x200] sm:$0xff]
      %v286 = vld [vmem:[%s1 + $0x208] sm:$0xff]
      %v287 = vld [vmem:[%s1 + $0x210] sm:$0xff]
      %v288 = vld [vmem:[%s1 + $0x218] sm:$0xff]
      %v289 = vld [vmem:[%s1 + $0x220] sm:$0xff]
      %v290 = vld [vmem:[%s1 + $0x228] sm:$0xff]
      %v291 = vld [vmem:[%s1 + $0x230] sm:$0xff]
      %v292 = vld [vmem:[%s1 + $0x238] sm:$0xff]
      %v293 = vld [vmem:[%s1 + $0x240] sm:$0xff]
      %v294 = vld [vmem:[%s1 + $0x248] sm:$0xff]
      %v295 = vld [vmem:[%s1 + $0x250] sm:$0xff]
      %v296 = vld [vmem:[%s1 + $0x258] sm:$0xff]
      %v297 = vld [vmem:[%s1 + $0x260] sm:$0xff]
      %v298 = vld [vmem:[%s1 + $0x268] sm:$0xff]
      %v299 = vld [vmem:[%s1 + $0x270] sm:$0xff]
      %v300 = vld [vmem:[%s1 + $0x278] sm:$0xff]
      %v301 = vld [vmem:[%s1 + $0x280] sm:$0xff]
      %v302 = vld [vmem:[%s1 + $0x288] sm:$0xff]
      %v303 = vld [vmem:[%s1 + $0x290] sm:$0xff]
      %v304 = vld [vmem:[%s1 + $0x298] sm:$0xff]
      %v305 = vld [vmem:[%s1 + $0x2a0] sm:$0xff]
      %v306 = vld [vmem:[%s1 + $0x2a8] sm:$0xff]
      %v307 = vld [vmem:[%s1 + $0x2b0] sm:$0xff]
      %v308 = vld [vmem:[%s1 + $0x2b8] sm:$0xff]
      %v309 = vld [vmem:[%s1 + $0x2c0] sm:$0xff]
      %v310 = vld [vmem:[%s1 + $0x2c8] sm:$0xff]
      %v311 = vld [vmem:[%s1 + $0x2d0] sm:$0xff]
      %v312 = vld [vmem:[%s1 + $0x2d8] sm:$0xff]
      %v313 = vld [vmem:[%s1 + $0x2e0] sm:$0xff]
      %v314 = vld [vmem:[%s1 + $0x2e8] sm:$0xff]
      %v315 = vld [vmem:[%s1 + $0x2f0] sm:$0xff]
      %v316 = vld [vmem:[%s1 + $0x2f8] sm:$0xff]
      %v317 = vld [vmem:[%s1 + $0x300] sm:$0xff]
      %v318 = vld [vmem:[%s1 + $0x308] sm:$0xff]
      %v319 = vld [vmem:[%s1 + $0x310] sm:$0xff]
      %v320 = vld [vmem:[%s1 + $0x318] sm:$0xff]
      %v321 = vld [vmem:[%s1 + $0x320] sm:$0xff]
      %v322 = vld [vmem:[%s1 + $0x328] sm:$0xff]
      %v323 = vld [vmem:[%s1 + $0x330] sm:$0xff]
      %v324 = vld [vmem:[%s1 + $0x338] sm:$0xff]
      %v325 = vld [vmem:[%s1 + $0x340] sm:$0xff]
      %v326 = vld [vmem:[%s1 + $0x348] sm:$0xff]
      %v327 = vld [vmem:[%s1 + $0x350] sm:$0xff]
      %v328 = vld [vmem:[%s1 + $0x358] sm:$0xff]
      %v329 = vld [vmem:[%s1 + $0x360] sm:$0xff]
      %v330 = vld [vmem:[%s1 + $0x368] sm:$0xff]
      %v331 = vld [vmem:[%s1 + $0x370] sm:$0xff]
      %v332 = vld [vmem:[%s1 + $0x378] sm:$0xff]
      %v333 = vld [vmem:[%s1 + $0x380] sm:$0xff]
      %v334 = vld [vmem:[%s1 + $0x388] sm:$0xff]
      %v335 = vld [vmem:[%s1 + $0x390] sm:$0xff]
      %v336 = vld [vmem:[%s1 + $0x398] sm:$0xff]
      %v337 = vld [vmem:[%s1 + $0x3a0] sm:$0xff]
      %v338 = vld [vmem:[%s1 + $0x3a8] sm:$0xff]
      %v339 = vld [vmem:[%s1 + $0x3b0] sm:$0xff]
      %v340 = vld [vmem:[%s1 + $0x3b8] sm:$0xff]
      %v341 = vld [vmem:[%s1 + $0x3c0] sm:$0xff]
      %v342 = vld [vmem:[%s1 + $0x3c8] sm:$0xff]
      %v343 = vld [vmem:[%s1 + $0x3d0] sm:$0xff]
      %v344 = vld [vmem:[%s1 + $0x3d8] sm:$0xff]
      %v345 = vld [vmem:[%s1 + $0x3e0] sm:$0xff]
      %v346 = vld [vmem:[%s1 + $0x3e8] sm:$0xff]
      %v347 = vld [vmem:[%s1 + $0x3f0] sm:$0xff]
      %v348 = vld [vmem:[%s1 + $0x3f8] sm:$0xff]
      %v349 = vld [vmem:[%s1 + $0x400] sm:$0xff]
      %v350 = vld [vmem:[%s1 + $0x408] sm:$0xff]
      %v351 = vld [vmem:[%s1 + $0x410] sm:$0xff]
      %v352 = vld [vmem:[%s1 + $0x418] sm:$0xff]
      %v353 = vld [vmem:[%s1 + $0x420] sm:$0xff]
      %v354 = vld [vmem:[%s1 + $0x428] sm:$0xff]
      %v355 = vld [vmem:[%s1 + $0x430] sm:$0xff]
      %v356 = vld [vmem:[%s1 + $0x438] sm:$0xff]
      %v357 = vld [vmem:[%s1 + $0x440] sm:$0xff]
      %v358 = vld [vmem:[%s1 + $0x448] sm:$0xff]
      %v359 = vld [vmem:[%s1 + $0x450] sm:$0xff]
      %v360 = vld [vmem:[%s1 + $0x458] sm:$0xff]
      %v361 = vld [vmem:[%s1 + $0x460] sm:$0xff]
      %v362 = vld [vmem:[%s1 + $0x468] sm:$0xff]
      %v363 = vld [vmem:[%s1 + $0x470] sm:$0xff]
      %v364 = vld [vmem:[%s1 + $0x478] sm:$0xff]
      %v365 = vld [vmem:[%s1 + $0x480] sm:$0xff]
      %v366 = vld [vmem:[%s1 + $0x488] sm:$0xff]
      %v367 = vld [vmem:[%s1 + $0x490] sm:$0xff]
      %v368 = vld [vmem:[%s1 + $0x498] sm:$0xff]
      %v369 = vld [vmem:[%s1 + $0x4a0] sm:$0xff]
      %v370 = vld [vmem:[%s1 + $0x4a8] sm:$0xff]
      %v371 = vld [vmem:[%s1 + $0x4b0] sm:$0xff]
      %v372 = vld [vmem:[%s1 + $0x4b8] sm:$0xff]
      %v373 = vld [vmem:[%s1 + $0x4c0] sm:$0xff]
      %v374 = vld [vmem:[%s1 + $0x4c8] sm:$0xff]
      %v375 = vld [vmem:[%s1 + $0x4d0] sm:$0xff]
      %v376 = vld [vmem:[%s1 + $0x4d8] sm:$0xff]
      %v377 = vld [vmem:[%s1 + $0x4e0] sm:$0xff]
      %v378 = vld [vmem:[%s1 + $0x4e8] sm:$0xff]
      %v379 = vld [vmem:[%s1 + $0x4f0] sm:$0xff]
      %v380 = vld [vmem:[%s1 + $0x4f8] sm:$0xff]
      %v381 = vld [vmem:[%s1 + $0x500] sm:$0xff]
      %v382 = vld [vmem:[%s1 + $0x508] sm:$0xff]
      %v383 = vld [vmem:[%s1 + $0x510] sm:$0xff]
      %v384 = vld [vmem:[%s1 + $0x518] sm:$0xff]
      %v385 = vld [vmem:[%s1 + $0x520] sm:$0xff]
      %v386 = vld [vmem:[%s1 + $0x528] sm:$0xff]
      %v387 = vld [vmem:[%s1 + $0x530] sm:$0xff]
      %v388 = vld [vmem:[%s1 + $0x538] sm:$0xff]
      %v389 = vld [vmem:[%s1 + $0x540] sm:$0xff]
      %v390 = vld [vmem:[%s1 + $0x548] sm:$0xff]
      %v391 = vld [vmem:[%s1 + $0x550] sm:$0xff]
      %v392 = vld [vmem:[%s1 + $0x558] sm:$0xff]
      %v393 = vld [vmem:[%s1 + $0x560] sm:$0xff]
      %v394 = vld [vmem:[%s1 + $0x568] sm:$0xff]
      %v395 = vld [vmem:[%s1 + $0x570] sm:$0xff]
      %v396 = vld [vmem:[%s1 + $0x578] sm:$0xff]
      %v397 = vld [vmem:[%s1 + $0x580] sm:$0xff]
      %v398 = vld [vmem:[%s1 + $0x588] sm:$0xff]
      %v399 = vld [vmem:[%s1 + $0x590] sm:$0xff]
      %v400 = vld [vmem:[%s1 + $0x598] sm:$0xff]
      %v401 = vld [vmem:[%s1 + $0x5a0] sm:$0xff]
      %v402 = vld [vmem:[%s1 + $0x5a8] sm:$0xff]
      %v403 = vld [vmem:[%s1 + $0x5b0] sm:$0xff]
      %v404 = vld [vmem:[%s1 + $0x5b8] sm:$0xff]
      %v405 = vld [vmem:[%s1 + $0x5c0] sm:$0xff]
      %v406 = vld [vmem:[%s1 + $0x5c8] sm:$0xff]
      %v407 = vld [vmem:[%s1 + $0x5d0] sm:$0xff]
      %v408 = vld [vmem:[%s1 + $0x5d8] sm:$0xff]
      %v409 = vld [vmem:[%s1 + $0x5e0] sm:$0xff]
      %v410 = vld [vmem:[%s1 + $0x5e8] sm:$0xff]
      %v411 = vld [vmem:[%s1 + $0x5f0] sm:$0xff]
      %v412 = vld [vmem:[%s1 + $0x5f8] sm:$0xff]
      %v413 = vld [vmem:[%s1 + $0x600] sm:$0xff]
      %v414 = vld [vmem:[%s1 + $0x608] sm:$0xff]
      %v415 = vld [vmem:[%s1 + $0x610] sm:$0xff]
      %v416 = vld [vmem:[%s1 + $0x618] sm:$0xff]
      %v417 = vld [vmem:[%s1 + $0x620] sm:$0xff]
      %v418 = vld [vmem:[%s1 + $0x628] sm:$0xff]
      %v419 = vld [vmem:[%s1 + $0x630] sm:$0xff]
      %v420 = vld [vmem:[%s1 + $0x638] sm:$0xff]
      %v421 = vld [vmem:[%s1 + $0x640] sm:$0xff]
      %v422 = vld [vmem:[%s1 + $0x648] sm:$0xff]
      %v423 = vld [vmem:[%s1 + $0x650] sm:$0xff]
      %v424 = vld [vmem:[%s1 + $0x658] sm:$0xff]
      %v425 = vld [vmem:[%s1 + $0x660] sm:$0xff]
      %v426 = vld [vmem:[%s1 + $0x668] sm:$0xff]
      %v427 = vld [vmem:[%s1 + $0x670] sm:$0xff]
      %v428 = vld [vmem:[%s1 + $0x678] sm:$0xff]
      %v429 = vld [vmem:[%s1 + $0x680] sm:$0xff]
      %v430 = vld [vmem:[%s1 + $0x688] sm:$0xff]
      %v431 = vld [vmem:[%s1 + $0x690] sm:$0xff]
      %v432 = vld [vmem:[%s1 + $0x698] sm:$0xff]
      %v433 = vld [vmem:[%s1 + $0x6a0] sm:$0xff]
      %v434 = vld [vmem:[%s1 + $0x6a8] sm:$0xff]
      %v435 = vld [vmem:[%s1 + $0x6b0] sm:$0xff]
      %v436 = vld [vmem:[%s1 + $0x6b8] sm:$0xff]
      %v437 = vld [vmem:[%s1 + $0x6c0] sm:$0xff]
      %v438 = vld [vmem:[%s1 + $0x6c8] sm:$0xff]
      %v439 = vld [vmem:[%s1 + $0x6d0] sm:$0xff]
      %v440 = vld [vmem:[%s1 + $0x6d8] sm:$0xff]
      %v441 = vld [vmem:[%s1 + $0x6e0] sm:$0xff]
      %v442 = vld [vmem:[%s1 + $0x6e8] sm:$0xff]
      %v443 = vld [vmem:[%s1 + $0x6f0] sm:$0xff]
      %v444 = vld [vmem:[%s1 + $0x6f8] sm:$0xff]
      %v445 = vld [vmem:[%s1 + $0x700] sm:$0xff]
      %v446 = vld [vmem:[%s1 + $0x708] sm:$0xff]
      %v447 = vld [vmem:[%s1 + $0x710] sm:$0xff]
      %v448 = vld [vmem:[%s1 + $0x718] sm:$0xff]
      %v449 = vld [vmem:[%s1 + $0x720] sm:$0xff]
      %v450 = vld [vmem:[%s1 + $0x728] sm:$0xff]
      %v451 = vld [vmem:[%s1 + $0x730] sm:$0xff]
      %v452 = vld [vmem:[%s1 + $0x738] sm:$0xff]
      %v453 = vld [vmem:[%s1 + $0x740] sm:$0xff]
      %v454 = vld [vmem:[%s1 + $0x748] sm:$0xff]
      %v455 = vld [vmem:[%s1 + $0x750] sm:$0xff]
      %v456 = vld [vmem:[%s1 + $0x758] sm:$0xff]
      %v457 = vld [vmem:[%s1 + $0x760] sm:$0xff]
      %v458 = vld [vmem:[%s1 + $0x768] sm:$0xff]
      %v459 = vld [vmem:[%s1 + $0x770] sm:$0xff]
      %v460 = vld [vmem:[%s1 + $0x778] sm:$0xff]
      %v461 = vld [vmem:[%s1 + $0x780] sm:$0xff]
      %v462 = vld [vmem:[%s1 + $0x788] sm:$0xff]
      %v463 = vld [vmem:[%s1 + $0x790] sm:$0xff]
      %v464 = vld [vmem:[%s1 + $0x798] sm:$0xff]
      %v465 = vld [vmem:[%s1 + $0x7a0] sm:$0xff]
      %v466 = vld [vmem:[%s1 + $0x7a8] sm:$0xff]
      %v467 = vld [vmem:[%s1 + $0x7b0] sm:$0xff]
      %v468 = vld [vmem:[%s1 + $0x7b8] sm:$0xff]
      %v469 = vld [vmem:[%s1 + $0x7c0] sm:$0xff]
      %v470 = vld [vmem:[%s1 + $0x7c8] sm:$0xff]
      %v471 = vld [vmem:[%s1 + $0x7d0] sm:$0xff]
      %v472 = vld [vmem:[%s1 + $0x7d8] sm:$0xff]
      %v473 = vld [vmem:[%s1 + $0x7e0] sm:$0xff]
      %v474 = vld [vmem:[%s1 + $0x7e8] sm:$0xff]
      %v475 = vld [vmem:[%s1 + $0x7f0] sm:$0xff]
      %v476 = vld [vmem:[%s1 + $0x7f8] sm:$0xff]
      %v477 = vld [vmem:[%s2] sm:$0xff]
      %v478 = vld [vmem:[%s2 + $0x8] sm:$0xff]
      %v481 = vlaneseq
      %v482 = vshrl.u32 %v481, 7
      %v483 = vsub.s32 0, %v482
      %v484 = vrot.slane %v477, %v483
      %v485 = vlaneseq
      %v486 = vshrl.u32 %v485, 7
      %v487 = vsub.s32 1, %v486
      %v488 = vrot.slane %v477, %v487
      %v489 = vlaneseq
      %v490 = vshrl.u32 %v489, 7
      %v491 = vsub.s32 2, %v490
      %v492 = vrot.slane %v477, %v491
      %v493 = vlaneseq
      %v494 = vshrl.u32 %v493, 7
      %v495 = vsub.s32 3, %v494
      %v496 = vrot.slane %v477, %v495
      %v497 = vlaneseq
      %v498 = vshrl.u32 %v497, 7
      %v499 = vsub.s32 4, %v498
      %v500 = vrot.slane %v477, %v499
      %v501 = vlaneseq
      %v502 = vshrl.u32 %v501, 7
      %v503 = vsub.s32 5, %v502
      %v504 = vrot.slane %v477, %v503
      %v505 = vlaneseq
      %v506 = vshrl.u32 %v505, 7
      %v507 = vsub.s32 6, %v506
      %v508 = vrot.slane %v477, %v507
      %v509 = vlaneseq
      %v510 = vshrl.u32 %v509, 7
      %v511 = vsub.s32 7, %v510
      %v512 = vrot.slane %v477, %v511
      %v513 = vlaneseq
      %v514 = vshrl.u32 %v513, 7
      %v515 = vsub.s32 0, %v514
      %v516 = vrot.slane %v478, %v515
      %v517 = vlaneseq
      %v518 = vshrl.u32 %v517, 7
      %v519 = vsub.s32 1, %v518
      %v520 = vrot.slane %v478, %v519
      %v521 = vlaneseq
      %v522 = vshrl.u32 %v521, 7
      %v523 = vsub.s32 2, %v522
      %v524 = vrot.slane %v478, %v523
      %v525 = vlaneseq
      %v526 = vshrl.u32 %v525, 7
      %v527 = vsub.s32 3, %v526
      %v528 = vrot.slane %v478, %v527
      %v529 = vlaneseq
      %v530 = vshrl.u32 %v529, 7
      %v531 = vsub.s32 4, %v530
      %v532 = vrot.slane %v478, %v531
      %v533 = vlaneseq
      %v534 = vshrl.u32 %v533, 7
      %v535 = vsub.s32 5, %v534
      %v536 = vrot.slane %v478, %v535
      %v537 = vlaneseq
      %v538 = vshrl.u32 %v537, 7
      %v539 = vsub.s32 6, %v538
      %v540 = vrot.slane %v478, %v539
      %v541 = vlaneseq
      %v542 = vshrl.u32 %v541, 7
      %v543 = vsub.s32 7, %v542
      %v544 = vrot.slane %v478, %v543
      %561 = vmatprep.subr.mxu0 %v222
      %562 = vmatpush1.msra.mxu0 %v221
      %563 = vmatprep.subr.mxu0 %v238
      %564 = vmatpush1.msra.mxu0 %v237
      %565 = vmatprep.subr.mxu0 %v254
      %566 = vmatpush1.msra.mxu0 %v253
      %567 = vmatprep.subr.mxu0 %v270
      %568 = vmatpush1.msra.mxu0 %v269
      %569 = vmatprep.subr.mxu0 %v286
      %570 = vmatpush1.msra.mxu0 %v285
      %571 = vmatprep.subr.mxu0 %v302
      %572 = vmatpush1.msra.mxu0 %v301
      %573 = vmatprep.subr.mxu0 %v318
      %574 = vmatpush1.msra.mxu0 %v317
      %575 = vmatprep.subr.mxu0 %v334
      %576 = vmatpush1.msra.mxu0 %v333
      %577 = vmatprep.subr.mxu0 %v350
      %578 = vmatpush1.msra.mxu0 %v349
      %579 = vmatprep.subr.mxu0 %v366
      %580 = vmatpush1.msra.mxu0 %v365
      %581 = vmatprep.subr.mxu0 %v382
      %582 = vmatpush1.msra.mxu0 %v381
      %583 = vmatprep.subr.mxu0 %v398
      %584 = vmatpush1.msra.mxu0 %v397
      %585 = vmatprep.subr.mxu0 %v414
      %586 = vmatpush1.msra.mxu0 %v413
      %587 = vmatprep.subr.mxu0 %v430
      %588 = vmatpush1.msra.mxu0 %v429
      %589 = vmatprep.subr.mxu0 %v446
      %590 = vmatpush1.msra.mxu0 %v445
      %591 = vmatprep.subr.mxu0 %v462
      %592 = vmatpush1.msra.mxu0 %v461
      %593 = vmatprep.subr.mxu0 0.0
      %594 = vmatpush1.msra.mxu0 0.0
      %595 = vmatprep.subr.mxu0 0.0
      %596 = vmatpush1.msra.mxu0 0.0
      %597 = vmatprep.subr.mxu0 0.0
      %598 = vmatpush1.msra.mxu0 0.0
      %599 = vmatprep.subr.mxu0 0.0
      %600 = vmatpush1.msra.mxu0 0.0
      %601 = vmatprep.subr.mxu0 0.0
      %602 = vmatpush1.msra.mxu0 0.0
      %603 = vmatprep.subr.mxu0 0.0
      %604 = vmatpush1.msra.mxu0 0.0
      %605 = vmatprep.subr.mxu0 0.0
      %606 = vmatpush1.msra.mxu0 0.0
      %607 = vmatprep.subr.mxu0 0.0
      %608 = vmatpush1.msra.mxu0 0.0
      %609 = vmatprep.subr.mxu0 0.0
      %610 = vmatpush1.msra.mxu0 0.0
      %611 = vmatprep.subr.mxu0 0.0
      %612 = vmatpush1.msra.mxu0 0.0
      %613 = vmatprep.subr.mxu0 0.0
      %614 = vmatpush1.msra.mxu0 0.0
      %615 = vmatprep.subr.mxu0 0.0
      %616 = vmatpush1.msra.mxu0 0.0
      %617 = vmatprep.subr.mxu0 0.0
      %618 = vmatpush1.msra.mxu0 0.0
      %619 = vmatprep.subr.mxu0 0.0
      %620 = vmatpush1.msra.mxu0 0.0
      %621 = vmatprep.subr.mxu0 0.0
      %622 = vmatpush1.msra.mxu0 0.0
      %623 = vmatprep.subr.mxu0 0.0
      %624 = vmatpush1.msra.mxu0 0.0
      %625 = vmatprep.mubr.f32.mxu0 0.0
      %626 = vmatmul.mubr.f32.gmra.mrb[0].mxu0 %v220
      %v627 = vpop.f32.mrb[0].mxu0
      %v628 = vadd.f32 %v484, %v627
      %v629 = vpop.f32.mrb[0].mxu0
      %v630 = vadd.f32 %v488, %v629
      %631 = vdwg.mxu0
      %632 = vmatprep.subr.mxu0 %v224
      %633 = vmatpush1.msra.mxu0 %v223
      %634 = vmatprep.subr.mxu0 %v240
      %635 = vmatpush1.msra.mxu0 %v239
      %636 = vmatprep.subr.mxu0 %v256
      %637 = vmatpush1.msra.mxu0 %v255
      %638 = vmatprep.subr.mxu0 %v272
      %639 = vmatpush1.msra.mxu0 %v271
      %640 = vmatprep.subr.mxu0 %v288
      %641 = vmatpush1.msra.mxu0 %v287
      %642 = vmatprep.subr.mxu0 %v304
      %643 = vmatpush1.msra.mxu0 %v303
      %644 = vmatprep.subr.mxu0 %v320
      %645 = vmatpush1.msra.mxu0 %v319
      %646 = vmatprep.subr.mxu0 %v336
      %647 = vmatpush1.msra.mxu0 %v335
      %648 = vmatprep.subr.mxu0 %v352
      %649 = vmatpush1.msra.mxu0 %v351
      %650 = vmatprep.subr.mxu0 %v368
      %651 = vmatpush1.msra.mxu0 %v367
      %652 = vmatprep.subr.mxu0 %v384
      %653 = vmatpush1.msra.mxu0 %v383
      %654 = vmatprep.subr.mxu0 %v400
      %655 = vmatpush1.msra.mxu0 %v399
      %656 = vmatprep.subr.mxu0 %v416
      %657 = vmatpush1.msra.mxu0 %v415
      %658 = vmatprep.subr.mxu0 %v432
      %659 = vmatpush1.msra.mxu0 %v431
      %660 = vmatprep.subr.mxu0 %v448
      %661 = vmatpush1.msra.mxu0 %v447
      %662 = vmatprep.subr.mxu0 %v464
      %663 = vmatpush1.msra.mxu0 %v463
      %664 = vmatprep.subr.mxu0 0.0
      %665 = vmatpush1.msra.mxu0 0.0
      %666 = vmatprep.subr.mxu0 0.0
      %667 = vmatpush1.msra.mxu0 0.0
      %668 = vmatprep.subr.mxu0 0.0
      %669 = vmatpush1.msra.mxu0 0.0
      %670 = vmatprep.subr.mxu0 0.0
      %671 = vmatpush1.msra.mxu0 0.0
      %672 = vmatprep.subr.mxu0 0.0
      %673 = vmatpush1.msra.mxu0 0.0
      %674 = vmatprep.subr.mxu0 0.0
      %675 = vmatpush1.msra.mxu0 0.0
      %676 = vmatprep.subr.mxu0 0.0
      %677 = vmatpush1.msra.mxu0 0.0
      %678 = vmatprep.subr.mxu0 0.0
      %679 = vmatpush1.msra.mxu0 0.0
      %680 = vmatprep.subr.mxu0 0.0
      %681 = vmatpush1.msra.mxu0 0.0
      %682 = vmatprep.subr.mxu0 0.0
      %683 = vmatpush1.msra.mxu0 0.0
      %684 = vmatprep.subr.mxu0 0.0
      %685 = vmatpush1.msra.mxu0 0.0
      %686 = vmatprep.subr.mxu0 0.0
      %687 = vmatpush1.msra.mxu0 0.0
      %688 = vmatprep.subr.mxu0 0.0
      %689 = vmatpush1.msra.mxu0 0.0
      %690 = vmatprep.subr.mxu0 0.0
      %691 = vmatpush1.msra.mxu0 0.0
      %692 = vmatprep.subr.mxu0 0.0
      %693 = vmatpush1.msra.mxu0 0.0
      %694 = vmatprep.subr.mxu0 0.0
      %695 = vmatpush1.msra.mxu0 0.0
      %696 = vmatprep.mubr.f32.mxu0 0.0
      %697 = vmatmul.mubr.f32.gmra.mrb[0].mxu0 %v220
      %v698 = vpop.f32.mrb[0].mxu0
      %v699 = vadd.f32 %v492, %v698
      %v700 = vpop.f32.mrb[0].mxu0
      %v701 = vadd.f32 %v496, %v700
      %702 = vdwg.mxu0
      %703 = vmatprep.subr.mxu0 %v226
      %704 = vmatpush1.msra.mxu0 %v225
      %705 = vmatprep.subr.mxu0 %v242
      %706 = vmatpush1.msra.mxu0 %v241
      %707 = vmatprep.subr.mxu0 %v258
      %708 = vmatpush1.msra.mxu0 %v257
      %709 = vmatprep.subr.mxu0 %v274
      %710 = vmatpush1.msra.mxu0 %v273
      %711 = vmatprep.subr.mxu0 %v290
      %712 = vmatpush1.msra.mxu0 %v289
      %713 = vmatprep.subr.mxu0 %v306
      %714 = vmatpush1.msra.mxu0 %v305
      %715 = vmatprep.subr.mxu0 %v322
      %716 = vmatpush1.msra.mxu0 %v321
      %717 = vmatprep.subr.mxu0 %v338
      %718 = vmatpush1.msra.mxu0 %v337
      %719 = vmatprep.subr.mxu0 %v354
      %720 = vmatpush1.msra.mxu0 %v353
      %721 = vmatprep.subr.mxu0 %v370
      %722 = vmatpush1.msra.mxu0 %v369
      %723 = vmatprep.subr.mxu0 %v386
      %724 = vmatpush1.msra.mxu0 %v385
      %725 = vmatprep.subr.mxu0 %v402
      %726 = vmatpush1.msra.mxu0 %v401
      %727 = vmatprep.subr.mxu0 %v418
      %728 = vmatpush1.msra.mxu0 %v417
      %729 = vmatprep.subr.mxu0 %v434
      %730 = vmatpush1.msra.mxu0 %v433
      %731 = vmatprep.subr.mxu0 %v450
      %732 = vmatpush1.msra.mxu0 %v449
      %733 = vmatprep.subr.mxu0 %v466
      %734 = vmatpush1.msra.mxu0 %v465
      %735 = vmatprep.subr.mxu0 0.0
      %736 = vmatpush1.msra.mxu0 0.0
      %737 = vmatprep.subr.mxu0 0.0
      %738 = vmatpush1.msra.mxu0 0.0
      %739 = vmatprep.subr.mxu0 0.0
      %740 = vmatpush1.msra.mxu0 0.0
      %741 = vmatprep.subr.mxu0 0.0
      %742 = vmatpush1.msra.mxu0 0.0
      %743 = vmatprep.subr.mxu0 0.0
      %744 = vmatpush1.msra.mxu0 0.0
      %745 = vmatprep.subr.mxu0 0.0
      %746 = vmatpush1.msra.mxu0 0.0
      %747 = vmatprep.subr.mxu0 0.0
      %748 = vmatpush1.msra.mxu0 0.0
      %749 = vmatprep.subr.mxu0 0.0
      %750 = vmatpush1.msra.mxu0 0.0
      %751 = vmatprep.subr.mxu0 0.0
      %752 = vmatpush1.msra.mxu0 0.0
      %753 = vmatprep.subr.mxu0 0.0
      %754 = vmatpush1.msra.mxu0 0.0
      %755 = vmatprep.subr.mxu0 0.0
      %756 = vmatpush1.msra.mxu0 0.0
      %757 = vmatprep.subr.mxu0 0.0
      %758 = vmatpush1.msra.mxu0 0.0
      %759 = vmatprep.subr.mxu0 0.0
      %760 = vmatpush1.msra.mxu0 0.0
      %761 = vmatprep.subr.mxu0 0.0
      %762 = vmatpush1.msra.mxu0 0.0
      %763 = vmatprep.subr.mxu0 0.0
      %764 = vmatpush1.msra.mxu0 0.0
      %765 = vmatprep.subr.mxu0 0.0
      %766 = vmatpush1.msra.mxu0 0.0
      %767 = vmatprep.mubr.f32.mxu0 0.0
      %768 = vmatmul.mubr.f32.gmra.mrb[0].mxu0 %v220
      %v769 = vpop.f32.mrb[0].mxu0
      %v770 = vadd.f32 %v500, %v769
      %v771 = vpop.f32.mrb[0].mxu0
      %v772 = vadd.f32 %v504, %v771
      %773 = vdwg.mxu0
      %774 = vmatprep.subr.mxu0 %v228
      %775 = vmatpush1.msra.mxu0 %v227
      %776 = vmatprep.subr.mxu0 %v244
      %777 = vmatpush1.msra.mxu0 %v243
      %778 = vmatprep.subr.mxu0 %v260
      %779 = vmatpush1.msra.mxu0 %v259
      %780 = vmatprep.subr.mxu0 %v276
      %781 = vmatpush1.msra.mxu0 %v275
      %782 = vmatprep.subr.mxu0 %v292
      %783 = vmatpush1.msra.mxu0 %v291
      %784 = vmatprep.subr.mxu0 %v308
      %785 = vmatpush1.msra.mxu0 %v307
      %786 = vmatprep.subr.mxu0 %v324
      %787 = vmatpush1.msra.mxu0 %v323
      %788 = vmatprep.subr.mxu0 %v340
      %789 = vmatpush1.msra.mxu0 %v339
      %790 = vmatprep.subr.mxu0 %v356
      %791 = vmatpush1.msra.mxu0 %v355
      %792 = vmatprep.subr.mxu0 %v372
      %793 = vmatpush1.msra.mxu0 %v371
      %794 = vmatprep.subr.mxu0 %v388
      %795 = vmatpush1.msra.mxu0 %v387
      %796 = vmatprep.subr.mxu0 %v404
      %797 = vmatpush1.msra.mxu0 %v403
      %798 = vmatprep.subr.mxu0 %v420
      %799 = vmatpush1.msra.mxu0 %v419
      %800 = vmatprep.subr.mxu0 %v436
      %801 = vmatpush1.msra.mxu0 %v435
      %802 = vmatprep.subr.mxu0 %v452
      %803 = vmatpush1.msra.mxu0 %v451
      %804 = vmatprep.subr.mxu0 %v468
      %805 = vmatpush1.msra.mxu0 %v467
      %806 = vmatprep.subr.mxu0 0.0
      %807 = vmatpush1.msra.mxu0 0.0
      %808 = vmatprep.subr.mxu0 0.0
      %809 = vmatpush1.msra.mxu0 0.0
      %810 = vmatprep.subr.mxu0 0.0
      %811 = vmatpush1.msra.mxu0 0.0
      %812 = vmatprep.subr.mxu0 0.0
      %813 = vmatpush1.msra.mxu0 0.0
      %814 = vmatprep.subr.mxu0 0.0
      %815 = vmatpush1.msra.mxu0 0.0
      %816 = vmatprep.subr.mxu0 0.0
      %817 = vmatpush1.msra.mxu0 0.0
      %818 = vmatprep.subr.mxu0 0.0
      %819 = vmatpush1.msra.mxu0 0.0
      %820 = vmatprep.subr.mxu0 0.0
      %821 = vmatpush1.msra.mxu0 0.0
      %822 = vmatprep.subr.mxu0 0.0
      %823 = vmatpush1.msra.mxu0 0.0
      %824 = vmatprep.subr.mxu0 0.0
      %825 = vmatpush1.msra.mxu0 0.0
      %826 = vmatprep.subr.mxu0 0.0
      %827 = vmatpush1.msra.mxu0 0.0
      %828 = vmatprep.subr.mxu0 0.0
      %829 = vmatpush1.msra.mxu0 0.0
      %830 = vmatprep.subr.mxu0 0.0
      %831 = vmatpush1.msra.mxu0 0.0
      %832 = vmatprep.subr.mxu0 0.0
      %833 = vmatpush1.msra.mxu0 0.0
      %834 = vmatprep.subr.mxu0 0.0
      %835 = vmatpush1.msra.mxu0 0.0
      %836 = vmatprep.subr.mxu0 0.0
      %837 = vmatpush1.msra.mxu0 0.0
      %838 = vmatprep.mubr.f32.mxu0 0.0
      %839 = vmatmul.mubr.f32.gmra.mrb[0].mxu0 %v220
      %v840 = vpop.f32.mrb[0].mxu0
      %v841 = vadd.f32 %v508, %v840
      %v842 = vpop.f32.mrb[0].mxu0
      %v843 = vadd.f32 %v512, %v842
      %844 = vdwg.mxu0
      %845 = vmatprep.subr.mxu0 %v230
      %846 = vmatpush1.msra.mxu0 %v229
      %847 = vmatprep.subr.mxu0 %v246
      %848 = vmatpush1.msra.mxu0 %v245
      %849 = vmatprep.subr.mxu0 %v262
      %850 = vmatpush1.msra.mxu0 %v261
      %851 = vmatprep.subr.mxu0 %v278
      %852 = vmatpush1.msra.mxu0 %v277
      %853 = vmatprep.subr.mxu0 %v294
      %854 = vmatpush1.msra.mxu0 %v293
      %855 = vmatprep.subr.mxu0 %v310
      %856 = vmatpush1.msra.mxu0 %v309
      %857 = vmatprep.subr.mxu0 %v326
      %858 = vmatpush1.msra.mxu0 %v325
      %859 = vmatprep.subr.mxu0 %v342
      %860 = vmatpush1.msra.mxu0 %v341
      %861 = vmatprep.subr.mxu0 %v358
      %862 = vmatpush1.msra.mxu0 %v357
      %863 = vmatprep.subr.mxu0 %v374
      %864 = vmatpush1.msra.mxu0 %v373
      %865 = vmatprep.subr.mxu0 %v390
      %866 = vmatpush1.msra.mxu0 %v389
      %867 = vmatprep.subr.mxu0 %v406
      %868 = vmatpush1.msra.mxu0 %v405
      %869 = vmatprep.subr.mxu0 %v422
      %870 = vmatpush1.msra.mxu0 %v421
      %871 = vmatprep.subr.mxu0 %v438
      %872 = vmatpush1.msra.mxu0 %v437
      %873 = vmatprep.subr.mxu0 %v454
      %874 = vmatpush1.msra.mxu0 %v453
      %875 = vmatprep.subr.mxu0 %v470
      %876 = vmatpush1.msra.mxu0 %v469
      %877 = vmatprep.subr.mxu0 0.0
      %878 = vmatpush1.msra.mxu0 0.0
      %879 = vmatprep.subr.mxu0 0.0
      %880 = vmatpush1.msra.mxu0 0.0
      %881 = vmatprep.subr.mxu0 0.0
      %882 = vmatpush1.msra.mxu0 0.0
      %883 = vmatprep.subr.mxu0 0.0
      %884 = vmatpush1.msra.mxu0 0.0
      %885 = vmatprep.subr.mxu0 0.0
      %886 = vmatpush1.msra.mxu0 0.0
      %887 = vmatprep.subr.mxu0 0.0
      %888 = vmatpush1.msra.mxu0 0.0
      %889 = vmatprep.subr.mxu0 0.0
      %890 = vmatpush1.msra.mxu0 0.0
      %891 = vmatprep.subr.mxu0 0.0
      %892 = vmatpush1.msra.mxu0 0.0
      %893 = vmatprep.subr.mxu0 0.0
      %894 = vmatpush1.msra.mxu0 0.0
      %895 = vmatprep.subr.mxu0 0.0
      %896 = vmatpush1.msra.mxu0 0.0
      %897 = vmatprep.subr.mxu0 0.0
      %898 = vmatpush1.msra.mxu0 0.0
      %899 = vmatprep.subr.mxu0 0.0
      %900 = vmatpush1.msra.mxu0 0.0
      %901 = vmatprep.subr.mxu0 0.0
      %902 = vmatpush1.msra.mxu0 0.0
      %903 = vmatprep.subr.mxu0 0.0
      %904 = vmatpush1.msra.mxu0 0.0
      %905 = vmatprep.subr.mxu0 0.0
      %906 = vmatpush1.msra.mxu0 0.0
      %907 = vmatprep.subr.mxu0 0.0
      %908 = vmatpush1.msra.mxu0 0.0
      %909 = vmatprep.mubr.f32.mxu0 0.0
      %910 = vmatmul.mubr.f32.gmra.mrb[0].mxu0 %v220
      %v911 = vpop.f32.mrb[0].mxu0
      %v912 = vadd.f32 %v516, %v911
      %v913 = vpop.f32.mrb[0].mxu0
      %v914 = vadd.f32 %v520, %v913
      %915 = vdwg.mxu0
      %916 = vmatprep.subr.mxu0 %v232
      %917 = vmatpush1.msra.mxu0 %v231
      %918 = vmatprep.subr.mxu0 %v248
      %919 = vmatpush1.msra.mxu0 %v247
      %920 = vmatprep.subr.mxu0 %v264
      %921 = vmatpush1.msra.mxu0 %v263
      %922 = vmatprep.subr.mxu0 %v280
      %923 = vmatpush1.msra.mxu0 %v279
      %924 = vmatprep.subr.mxu0 %v296
      %925 = vmatpush1.msra.mxu0 %v295
      %926 = vmatprep.subr.mxu0 %v312
      %927 = vmatpush1.msra.mxu0 %v311
      %928 = vmatprep.subr.mxu0 %v328
      %929 = vmatpush1.msra.mxu0 %v327
      %930 = vmatprep.subr.mxu0 %v344
      %931 = vmatpush1.msra.mxu0 %v343
      %932 = vmatprep.subr.mxu0 %v360
      %933 = vmatpush1.msra.mxu0 %v359
      %934 = vmatprep.subr.mxu0 %v376
      %935 = vmatpush1.msra.mxu0 %v375
      %936 = vmatprep.subr.mxu0 %v392
      %937 = vmatpush1.msra.mxu0 %v391
      %938 = vmatprep.subr.mxu0 %v408
      %939 = vmatpush1.msra.mxu0 %v407
      %940 = vmatprep.subr.mxu0 %v424
      %941 = vmatpush1.msra.mxu0 %v423
      %942 = vmatprep.subr.mxu0 %v440
      %943 = vmatpush1.msra.mxu0 %v439
      %944 = vmatprep.subr.mxu0 %v456
      %945 = vmatpush1.msra.mxu0 %v455
      %946 = vmatprep.subr.mxu0 %v472
      %947 = vmatpush1.msra.mxu0 %v471
      %948 = vmatprep.subr.mxu0 0.0
      %949 = vmatpush1.msra.mxu0 0.0
      %950 = vmatprep.subr.mxu0 0.0
      %951 = vmatpush1.msra.mxu0 0.0
      %952 = vmatprep.subr.mxu0 0.0
      %953 = vmatpush1.msra.mxu0 0.0
      %954 = vmatprep.subr.mxu0 0.0
      %955 = vmatpush1.msra.mxu0 0.0
      %956 = vmatprep.subr.mxu0 0.0
      %957 = vmatpush1.msra.mxu0 0.0
      %958 = vmatprep.subr.mxu0 0.0
      %959 = vmatpush1.msra.mxu0 0.0
      %960 = vmatprep.subr.mxu0 0.0
      %961 = vmatpush1.msra.mxu0 0.0
      %962 = vmatprep.subr.mxu0 0.0
      %963 = vmatpush1.msra.mxu0 0.0
      %964 = vmatprep.subr.mxu0 0.0
      %965 = vmatpush1.msra.mxu0 0.0
      %966 = vmatprep.subr.mxu0 0.0
      %967 = vmatpush1.msra.mxu0 0.0
      %968 = vmatprep.subr.mxu0 0.0
      %969 = vmatpush1.msra.mxu0 0.0
      %970 = vmatprep.subr.mxu0 0.0
      %971 = vmatpush1.msra.mxu0 0.0
      %972 = vmatprep.subr.mxu0 0.0
      %973 = vmatpush1.msra.mxu0 0.0
      %974 = vmatprep.subr.mxu0 0.0
      %975 = vmatpush1.msra.mxu0 0.0
      %976 = vmatprep.subr.mxu0 0.0
      %977 = vmatpush1.msra.mxu0 0.0
      %978 = vmatprep.subr.mxu0 0.0
      %979 = vmatpush1.msra.mxu0 0.0
      %980 = vmatprep.mubr.f32.mxu0 0.0
      %981 = vmatmul.mubr.f32.gmra.mrb[0].mxu0 %v220
      %v982 = vpop.f32.mrb[0].mxu0
      %v983 = vadd.f32 %v524, %v982
      %v984 = vpop.f32.mrb[0].mxu0
      %v985 = vadd.f32 %v528, %v984
      %986 = vdwg.mxu0
      %987 = vmatprep.subr.mxu0 %v234
      %988 = vmatpush1.msra.mxu0 %v233
      %989 = vmatprep.subr.mxu0 %v250
      %990 = vmatpush1.msra.mxu0 %v249
      %991 = vmatprep.subr.mxu0 %v266
      %992 = vmatpush1.msra.mxu0 %v265
      %993 = vmatprep.subr.mxu0 %v282
      %994 = vmatpush1.msra.mxu0 %v281
      %995 = vmatprep.subr.mxu0 %v298
      %996 = vmatpush1.msra.mxu0 %v297
      %997 = vmatprep.subr.mxu0 %v314
      %998 = vmatpush1.msra.mxu0 %v313
      %999 = vmatprep.subr.mxu0 %v330
      %1000 = vmatpush1.msra.mxu0 %v329
      %1001 = vmatprep.subr.mxu0 %v346
      %1002 = vmatpush1.msra.mxu0 %v345
      %1003 = vmatprep.subr.mxu0 %v362
      %1004 = vmatpush1.msra.mxu0 %v361
      %1005 = vmatprep.subr.mxu0 %v378
      %1006 = vmatpush1.msra.mxu0 %v377
      %1007 = vmatprep.subr.mxu0 %v394
      %1008 = vmatpush1.msra.mxu0 %v393
      %1009 = vmatprep.subr.mxu0 %v410
      %1010 = vmatpush1.msra.mxu0 %v409
      %1011 = vmatprep.subr.mxu0 %v426
      %1012 = vmatpush1.msra.mxu0 %v425
      %1013 = vmatprep.subr.mxu0 %v442
      %1014 = vmatpush1.msra.mxu0 %v441
      %1015 = vmatprep.subr.mxu0 %v458
      %1016 = vmatpush1.msra.mxu0 %v457
      %1017 = vmatprep.subr.mxu0 %v474
      %1018 = vmatpush1.msra.mxu0 %v473
      %1019 = vmatprep.subr.mxu0 0.0
      %1020 = vmatpush1.msra.mxu0 0.0
      %1021 = vmatprep.subr.mxu0 0.0
      %1022 = vmatpush1.msra.mxu0 0.0
      %1023 = vmatprep.subr.mxu0 0.0
      %1024 = vmatpush1.msra.mxu0 0.0
      %1025 = vmatprep.subr.mxu0 0.0
      %1026 = vmatpush1.msra.mxu0 0.0
      %1027 = vmatprep.subr.mxu0 0.0
      %1028 = vmatpush1.msra.mxu0 0.0
      %1029 = vmatprep.subr.mxu0 0.0
      %1030 = vmatpush1.msra.mxu0 0.0
      %1031 = vmatprep.subr.mxu0 0.0
      %1032 = vmatpush1.msra.mxu0 0.0
      %1033 = vmatprep.subr.mxu0 0.0
      %1034 = vmatpush1.msra.mxu0 0.0
      %1035 = vmatprep.subr.mxu0 0.0
      %1036 = vmatpush1.msra.mxu0 0.0
      %1037 = vmatprep.subr.mxu0 0.0
      %1038 = vmatpush1.msra.mxu0 0.0
      %1039 = vmatprep.subr.mxu0 0.0
      %1040 = vmatpush1.msra.mxu0 0.0
      %1041 = vmatprep.subr.mxu0 0.0
      %1042 = vmatpush1.msra.mxu0 0.0
      %1043 = vmatprep.subr.mxu0 0.0
      %1044 = vmatpush1.msra.mxu0 0.0
      %1045 = vmatprep.subr.mxu0 0.0
      %1046 = vmatpush1.msra.mxu0 0.0
      %1047 = vmatprep.subr.mxu0 0.0
      %1048 = vmatpush1.msra.mxu0 0.0
      %1049 = vmatprep.subr.mxu0 0.0
      %1050 = vmatpush1.msra.mxu0 0.0
      %1051 = vmatprep.mubr.f32.mxu0 0.0
      %1052 = vmatmul.mubr.f32.gmra.mrb[0].mxu0 %v220
      %v1053 = vpop.f32.mrb[0].mxu0
      %v1054 = vadd.f32 %v532, %v1053
      %v1055 = vpop.f32.mrb[0].mxu0
      %v1056 = vadd.f32 %v536, %v1055
      %1057 = vdwg.mxu0
      %1058 = vmatprep.subr.mxu0 %v236
      %1059 = vmatpush1.msra.mxu0 %v235
      %1060 = vmatprep.subr.mxu0 %v252
      %1061 = vmatpush1.msra.mxu0 %v251
      %1062 = vmatprep.subr.mxu0 %v268
      %1063 = vmatpush1.msra.mxu0 %v267
      %1064 = vmatprep.subr.mxu0 %v284
      %1065 = vmatpush1.msra.mxu0 %v283
      %1066 = vmatprep.subr.mxu0 %v300
      %1067 = vmatpush1.msra.mxu0 %v299
      %1068 = vmatprep.subr.mxu0 %v316
      %1069 = vmatpush1.msra.mxu0 %v315
      %1070 = vmatprep.subr.mxu0 %v332
      %1071 = vmatpush1.msra.mxu0 %v331
      %1072 = vmatprep.subr.mxu0 %v348
      %1073 = vmatpush1.msra.mxu0 %v347
      %1074 = vmatprep.subr.mxu0 %v364
      %1075 = vmatpush1.msra.mxu0 %v363
      %1076 = vmatprep.subr.mxu0 %v380
      %1077 = vmatpush1.msra.mxu0 %v379
      %1078 = vmatprep.subr.mxu0 %v396
      %1079 = vmatpush1.msra.mxu0 %v395
      %1080 = vmatprep.subr.mxu0 %v412
      %1081 = vmatpush1.msra.mxu0 %v411
      %1082 = vmatprep.subr.mxu0 %v428
      %1083 = vmatpush1.msra.mxu0 %v427
      %1084 = vmatprep.subr.mxu0 %v444
      %1085 = vmatpush1.msra.mxu0 %v443
      %1086 = vmatprep.subr.mxu0 %v460
      %1087 = vmatpush1.msra.mxu0 %v459
      %1088 = vmatprep.subr.mxu0 %v476
      %1089 = vmatpush1.msra.mxu0 %v475
      %1090 = vmatprep.subr.mxu0 0.0
      %1091 = vmatpush1.msra.mxu0 0.0
      %1092 = vmatprep.subr.mxu0 0.0
      %1093 = vmatpush1.msra.mxu0 0.0
      %1094 = vmatprep.subr.mxu0 0.0
      %1095 = vmatpush1.msra.mxu0 0.0
      %1096 = vmatprep.subr.mxu0 0.0
      %1097 = vmatpush1.msra.mxu0 0.0
      %1098 = vmatprep.subr.mxu0 0.0
      %1099 = vmatpush1.msra.mxu0 0.0
      %1100 = vmatprep.subr.mxu0 0.0
      %1101 = vmatpush1.msra.mxu0 0.0
      %1102 = vmatprep.subr.mxu0 0.0
      %1103 = vmatpush1.msra.mxu0 0.0
      %1104 = vmatprep.subr.mxu0 0.0
      %1105 = vmatpush1.msra.mxu0 0.0
      %1106 = vmatprep.subr.mxu0 0.0
      %1107 = vmatpush1.msra.mxu0 0.0
      %1108 = vmatprep.subr.mxu0 0.0
      %1109 = vmatpush1.msra.mxu0 0.0
      %1110 = vmatprep.subr.mxu0 0.0
      %1111 = vmatpush1.msra.mxu0 0.0
      %1112 = vmatprep.subr.mxu0 0.0
      %1113 = vmatpush1.msra.mxu0 0.0
      %1114 = vmatprep.subr.mxu0 0.0
      %1115 = vmatpush1.msra.mxu0 0.0
      %1116 = vmatprep.subr.mxu0 0.0
      %1117 = vmatpush1.msra.mxu0 0.0
      %1118 = vmatprep.subr.mxu0 0.0
      %1119 = vmatpush1.msra.mxu0 0.0
      %1120 = vmatprep.subr.mxu0 0.0
      %1121 = vmatpush1.msra.mxu0 0.0
      %1122 = vmatprep.mubr.f32.mxu0 0.0
      %1123 = vmatmul.mubr.f32.gmra.mrb[0].mxu0 %v220
      %v1124 = vpop.f32.mrb[0].mxu0
      %v1125 = vadd.f32 %v540, %v1124
      %v1126 = vpop.f32.mrb[0].mxu0
      %v1127 = vadd.f32 %v544, %v1126
      %1128 = vdwg.mxu0
      %v1129 = vmax.f32 %v628, 0.0
      %v1130 = vmax.f32 %v630, 0.0
      %v1131 = vmax.f32 %v699, 0.0
      %v1132 = vmax.f32 %v701, 0.0
      %v1133 = vmax.f32 %v770, 0.0
      %v1134 = vmax.f32 %v772, 0.0
      %v1135 = vmax.f32 %v841, 0.0
      %v1136 = vmax.f32 %v843, 0.0
      %v1137 = vmax.f32 %v912, 0.0
      %v1138 = vmax.f32 %v914, 0.0
      %v1139 = vmax.f32 %v983, 0.0
      %v1140 = vmax.f32 %v985, 0.0
      %v1141 = vmax.f32 %v1054, 0.0
      %v1142 = vmax.f32 %v1056, 0.0
      %v1143 = vmax.f32 %v1125, 0.0
      %v1144 = vmax.f32 %v1127, 0.0
      %v1145 = vld [vmem:[%s3] sm:$0xff]
      %v1146 = vld [vmem:[%s3 + $0x8] sm:$0xff]
      %v1147 = vld [vmem:[%s3 + $0x10] sm:$0xff]
      %v1148 = vld [vmem:[%s3 + $0x18] sm:$0xff]
      %v1149 = vld [vmem:[%s3 + $0x20] sm:$0xff]
      %v1150 = vld [vmem:[%s3 + $0x28] sm:$0xff]
      %v1151 = vld [vmem:[%s3 + $0x30] sm:$0xff]
      %v1152 = vld [vmem:[%s3 + $0x38] sm:$0xff]
      %v1153 = vld [vmem:[%s3 + $0x40] sm:$0xff]
      %v1154 = vld [vmem:[%s3 + $0x48] sm:$0xff]
      %v1155 = vld [vmem:[%s3 + $0x50] sm:$0xff]
      %v1156 = vld [vmem:[%s3 + $0x58] sm:$0xff]
      %v1157 = vld [vmem:[%s3 + $0x60] sm:$0xff]
      %v1158 = vld [vmem:[%s3 + $0x68] sm:$0xff]
      %v1159 = vld [vmem:[%s3 + $0x70] sm:$0xff]
      %v1160 = vld [vmem:[%s3 + $0x78] sm:$0xff]
      %v1161 = vld [vmem:[%s3 + $0x80] sm:$0xff]
      %v1162 = vld [vmem:[%s3 + $0x88] sm:$0xff]
      %v1163 = vld [vmem:[%s3 + $0x90] sm:$0xff]
      %v1164 = vld [vmem:[%s3 + $0x98] sm:$0xff]
      %v1165 = vld [vmem:[%s3 + $0xa0] sm:$0xff]
      %v1166 = vld [vmem:[%s3 + $0xa8] sm:$0xff]
      %v1167 = vld [vmem:[%s3 + $0xb0] sm:$0xff]
      %v1168 = vld [vmem:[%s3 + $0xb8] sm:$0xff]
      %v1169 = vld [vmem:[%s3 + $0xc0] sm:$0xff]
      %v1170 = vld [vmem:[%s3 + $0xc8] sm:$0xff]
      %v1171 = vld [vmem:[%s3 + $0xd0] sm:$0xff]
      %v1172 = vld [vmem:[%s3 + $0xd8] sm:$0xff]
      %v1173 = vld [vmem:[%s3 + $0xe0] sm:$0xff]
      %v1174 = vld [vmem:[%s3 + $0xe8] sm:$0xff]
      %v1175 = vld [vmem:[%s3 + $0xf0] sm:$0xff]
      %v1176 = vld [vmem:[%s3 + $0xf8] sm:$0xff]
      %v1177 = vld [vmem:[%s3 + $0x100] sm:$0xff]
      %v1178 = vld [vmem:[%s3 + $0x108] sm:$0xff]
      %v1179 = vld [vmem:[%s3 + $0x110] sm:$0xff]
      %v1180 = vld [vmem:[%s3 + $0x118] sm:$0xff]
      %v1181 = vld [vmem:[%s3 + $0x120] sm:$0xff]
      %v1182 = vld [vmem:[%s3 + $0x128] sm:$0xff]
      %v1183 = vld [vmem:[%s3 + $0x130] sm:$0xff]
      %v1184 = vld [vmem:[%s3 + $0x138] sm:$0xff]
      %v1185 = vld [vmem:[%s3 + $0x140] sm:$0xff]
      %v1186 = vld [vmem:[%s3 + $0x148] sm:$0xff]
      %v1187 = vld [vmem:[%s3 + $0x150] sm:$0xff]
      %v1188 = vld [vmem:[%s3 + $0x158] sm:$0xff]
      %v1189 = vld [vmem:[%s3 + $0x160] sm:$0xff]
      %v1190 = vld [vmem:[%s3 + $0x168] sm:$0xff]
      %v1191 = vld [vmem:[%s3 + $0x170] sm:$0xff]
      %v1192 = vld [vmem:[%s3 + $0x178] sm:$0xff]
      %v1193 = vld [vmem:[%s3 + $0x180] sm:$0xff]
      %v1194 = vld [vmem:[%s3 + $0x188] sm:$0xff]
      %v1195 = vld [vmem:[%s3 + $0x190] sm:$0xff]
      %v1196 = vld [vmem:[%s3 + $0x198] sm:$0xff]
      %v1197 = vld [vmem:[%s3 + $0x1a0] sm:$0xff]
      %v1198 = vld [vmem:[%s3 + $0x1a8] sm:$0xff]
      %v1199 = vld [vmem:[%s3 + $0x1b0] sm:$0xff]
      %v1200 = vld [vmem:[%s3 + $0x1b8] sm:$0xff]
      %v1201 = vld [vmem:[%s3 + $0x1c0] sm:$0xff]
      %v1202 = vld [vmem:[%s3 + $0x1c8] sm:$0xff]
      %v1203 = vld [vmem:[%s3 + $0x1d0] sm:$0xff]
      %v1204 = vld [vmem:[%s3 + $0x1d8] sm:$0xff]
      %v1205 = vld [vmem:[%s3 + $0x1e0] sm:$0xff]
      %v1206 = vld [vmem:[%s3 + $0x1e8] sm:$0xff]
      %v1207 = vld [vmem:[%s3 + $0x1f0] sm:$0xff]
      %v1208 = vld [vmem:[%s3 + $0x1f8] sm:$0xff]
      %v1209 = vld [vmem:[%s3 + $0x200] sm:$0xff]
      %v1210 = vld [vmem:[%s3 + $0x208] sm:$0xff]
      %v1211 = vld [vmem:[%s3 + $0x210] sm:$0xff]
      %v1212 = vld [vmem:[%s3 + $0x218] sm:$0xff]
      %v1213 = vld [vmem:[%s3 + $0x220] sm:$0xff]
      %v1214 = vld [vmem:[%s3 + $0x228] sm:$0xff]
      %v1215 = vld [vmem:[%s3 + $0x230] sm:$0xff]
      %v1216 = vld [vmem:[%s3 + $0x238] sm:$0xff]
      %v1217 = vld [vmem:[%s3 + $0x240] sm:$0xff]
      %v1218 = vld [vmem:[%s3 + $0x248] sm:$0xff]
      %v1219 = vld [vmem:[%s3 + $0x250] sm:$0xff]
      %v1220 = vld [vmem:[%s3 + $0x258] sm:$0xff]
      %v1221 = vld [vmem:[%s3 + $0x260] sm:$0xff]
      %v1222 = vld [vmem:[%s3 + $0x268] sm:$0xff]
      %v1223 = vld [vmem:[%s3 + $0x270] sm:$0xff]
      %v1224 = vld [vmem:[%s3 + $0x278] sm:$0xff]
      %v1225 = vld [vmem:[%s3 + $0x280] sm:$0xff]
      %v1226 = vld [vmem:[%s3 + $0x288] sm:$0xff]
      %v1227 = vld [vmem:[%s3 + $0x290] sm:$0xff]
      %v1228 = vld [vmem:[%s3 + $0x298] sm:$0xff]
      %v1229 = vld [vmem:[%s3 + $0x2a0] sm:$0xff]
      %v1230 = vld [vmem:[%s3 + $0x2a8] sm:$0xff]
      %v1231 = vld [vmem:[%s3 + $0x2b0] sm:$0xff]
      %v1232 = vld [vmem:[%s3 + $0x2b8] sm:$0xff]
      %v1233 = vld [vmem:[%s3 + $0x2c0] sm:$0xff]
      %v1234 = vld [vmem:[%s3 + $0x2c8] sm:$0xff]
      %v1235 = vld [vmem:[%s3 + $0x2d0] sm:$0xff]
      %v1236 = vld [vmem:[%s3 + $0x2d8] sm:$0xff]
      %v1237 = vld [vmem:[%s3 + $0x2e0] sm:$0xff]
      %v1238 = vld [vmem:[%s3 + $0x2e8] sm:$0xff]
      %v1239 = vld [vmem:[%s3 + $0x2f0] sm:$0xff]
      %v1240 = vld [vmem:[%s3 + $0x2f8] sm:$0xff]
      %v1241 = vld [vmem:[%s3 + $0x300] sm:$0xff]
      %v1242 = vld [vmem:[%s3 + $0x308] sm:$0xff]
      %v1243 = vld [vmem:[%s3 + $0x310] sm:$0xff]
      %v1244 = vld [vmem:[%s3 + $0x318] sm:$0xff]
      %v1245 = vld [vmem:[%s3 + $0x320] sm:$0xff]
      %v1246 = vld [vmem:[%s3 + $0x328] sm:$0xff]
      %v1247 = vld [vmem:[%s3 + $0x330] sm:$0xff]
      %v1248 = vld [vmem:[%s3 + $0x338] sm:$0xff]
      %v1249 = vld [vmem:[%s3 + $0x340] sm:$0xff]
      %v1250 = vld [vmem:[%s3 + $0x348] sm:$0xff]
      %v1251 = vld [vmem:[%s3 + $0x350] sm:$0xff]
      %v1252 = vld [vmem:[%s3 + $0x358] sm:$0xff]
      %v1253 = vld [vmem:[%s3 + $0x360] sm:$0xff]
      %v1254 = vld [vmem:[%s3 + $0x368] sm:$0xff]
      %v1255 = vld [vmem:[%s3 + $0x370] sm:$0xff]
      %v1256 = vld [vmem:[%s3 + $0x378] sm:$0xff]
      %v1257 = vld [vmem:[%s3 + $0x380] sm:$0xff]
      %v1258 = vld [vmem:[%s3 + $0x388] sm:$0xff]
      %v1259 = vld [vmem:[%s3 + $0x390] sm:$0xff]
      %v1260 = vld [vmem:[%s3 + $0x398] sm:$0xff]
      %v1261 = vld [vmem:[%s3 + $0x3a0] sm:$0xff]
      %v1262 = vld [vmem:[%s3 + $0x3a8] sm:$0xff]
      %v1263 = vld [vmem:[%s3 + $0x3b0] sm:$0xff]
      %v1264 = vld [vmem:[%s3 + $0x3b8] sm:$0xff]
      %v1265 = vld [vmem:[%s3 + $0x3c0] sm:$0xff]
      %v1266 = vld [vmem:[%s3 + $0x3c8] sm:$0xff]
      %v1267 = vld [vmem:[%s3 + $0x3d0] sm:$0xff]
      %v1268 = vld [vmem:[%s3 + $0x3d8] sm:$0xff]
      %v1269 = vld [vmem:[%s3 + $0x3e0] sm:$0xff]
      %v1270 = vld [vmem:[%s3 + $0x3e8] sm:$0xff]
      %v1271 = vld [vmem:[%s3 + $0x3f0] sm:$0xff]
      %v1272 = vld [vmem:[%s3 + $0x3f8] sm:$0xff]
      %v1273 = vld [vmem:[%s3 + $0x400] sm:$0xff]
      %v1274 = vld [vmem:[%s3 + $0x408] sm:$0xff]
      %v1275 = vld [vmem:[%s3 + $0x410] sm:$0xff]
      %v1276 = vld [vmem:[%s3 + $0x418] sm:$0xff]
      %v1277 = vld [vmem:[%s3 + $0x420] sm:$0xff]
      %v1278 = vld [vmem:[%s3 + $0x428] sm:$0xff]
      %v1279 = vld [vmem:[%s3 + $0x430] sm:$0xff]
      %v1280 = vld [vmem:[%s3 + $0x438] sm:$0xff]
      %v1281 = vld [vmem:[%s3 + $0x440] sm:$0xff]
      %v1282 = vld [vmem:[%s3 + $0x448] sm:$0xff]
      %v1283 = vld [vmem:[%s3 + $0x450] sm:$0xff]
      %v1284 = vld [vmem:[%s3 + $0x458] sm:$0xff]
      %v1285 = vld [vmem:[%s3 + $0x460] sm:$0xff]
      %v1286 = vld [vmem:[%s3 + $0x468] sm:$0xff]
      %v1287 = vld [vmem:[%s3 + $0x470] sm:$0xff]
      %v1288 = vld [vmem:[%s3 + $0x478] sm:$0xff]
      %v1289 = vld [vmem:[%s3 + $0x480] sm:$0xff]
      %v1290 = vld [vmem:[%s3 + $0x488] sm:$0xff]
      %v1291 = vld [vmem:[%s3 + $0x490] sm:$0xff]
      %v1292 = vld [vmem:[%s3 + $0x498] sm:$0xff]
      %v1293 = vld [vmem:[%s3 + $0x4a0] sm:$0xff]
      %v1294 = vld [vmem:[%s3 + $0x4a8] sm:$0xff]
      %v1295 = vld [vmem:[%s3 + $0x4b0] sm:$0xff]
      %v1296 = vld [vmem:[%s3 + $0x4b8] sm:$0xff]
      %v1297 = vld [vmem:[%s3 + $0x4c0] sm:$0xff]
      %v1298 = vld [vmem:[%s3 + $0x4c8] sm:$0xff]
      %v1299 = vld [vmem:[%s3 + $0x4d0] sm:$0xff]
      %v1300 = vld [vmem:[%s3 + $0x4d8] sm:$0xff]
      %v1301 = vld [vmem:[%s3 + $0x4e0] sm:$0xff]
      %v1302 = vld [vmem:[%s3 + $0x4e8] sm:$0xff]
      %v1303 = vld [vmem:[%s3 + $0x4f0] sm:$0xff]
      %v1304 = vld [vmem:[%s3 + $0x4f8] sm:$0xff]
      %v1305 = vld [vmem:[%s3 + $0x500] sm:$0xff]
      %v1306 = vld [vmem:[%s3 + $0x508] sm:$0xff]
      %v1307 = vld [vmem:[%s3 + $0x510] sm:$0xff]
      %v1308 = vld [vmem:[%s3 + $0x518] sm:$0xff]
      %v1309 = vld [vmem:[%s3 + $0x520] sm:$0xff]
      %v1310 = vld [vmem:[%s3 + $0x528] sm:$0xff]
      %v1311 = vld [vmem:[%s3 + $0x530] sm:$0xff]
      %v1312 = vld [vmem:[%s3 + $0x538] sm:$0xff]
      %v1313 = vld [vmem:[%s3 + $0x540] sm:$0xff]
      %v1314 = vld [vmem:[%s3 + $0x548] sm:$0xff]
      %v1315 = vld [vmem:[%s3 + $0x550] sm:$0xff]
      %v1316 = vld [vmem:[%s3 + $0x558] sm:$0xff]
      %v1317 = vld [vmem:[%s3 + $0x560] sm:$0xff]
      %v1318 = vld [vmem:[%s3 + $0x568] sm:$0xff]
      %v1319 = vld [vmem:[%s3 + $0x570] sm:$0xff]
      %v1320 = vld [vmem:[%s3 + $0x578] sm:$0xff]
      %v1321 = vld [vmem:[%s3 + $0x580] sm:$0xff]
      %v1322 = vld [vmem:[%s3 + $0x588] sm:$0xff]
      %v1323 = vld [vmem:[%s3 + $0x590] sm:$0xff]
      %v1324 = vld [vmem:[%s3 + $0x598] sm:$0xff]
      %v1325 = vld [vmem:[%s3 + $0x5a0] sm:$0xff]
      %v1326 = vld [vmem:[%s3 + $0x5a8] sm:$0xff]
      %v1327 = vld [vmem:[%s3 + $0x5b0] sm:$0xff]
      %v1328 = vld [vmem:[%s3 + $0x5b8] sm:$0xff]
      %v1329 = vld [vmem:[%s3 + $0x5c0] sm:$0xff]
      %v1330 = vld [vmem:[%s3 + $0x5c8] sm:$0xff]
      %v1331 = vld [vmem:[%s3 + $0x5d0] sm:$0xff]
      %v1332 = vld [vmem:[%s3 + $0x5d8] sm:$0xff]
      %v1333 = vld [vmem:[%s3 + $0x5e0] sm:$0xff]
      %v1334 = vld [vmem:[%s3 + $0x5e8] sm:$0xff]
      %v1335 = vld [vmem:[%s3 + $0x5f0] sm:$0xff]
      %v1336 = vld [vmem:[%s3 + $0x5f8] sm:$0xff]
      %v1337 = vld [vmem:[%s3 + $0x600] sm:$0xff]
      %v1338 = vld [vmem:[%s3 + $0x608] sm:$0xff]
      %v1339 = vld [vmem:[%s3 + $0x610] sm:$0xff]
      %v1340 = vld [vmem:[%s3 + $0x618] sm:$0xff]
      %v1341 = vld [vmem:[%s3 + $0x620] sm:$0xff]
      %v1342 = vld [vmem:[%s3 + $0x628] sm:$0xff]
      %v1343 = vld [vmem:[%s3 + $0x630] sm:$0xff]
      %v1344 = vld [vmem:[%s3 + $0x638] sm:$0xff]
      %v1345 = vld [vmem:[%s3 + $0x640] sm:$0xff]
      %v1346 = vld [vmem:[%s3 + $0x648] sm:$0xff]
      %v1347 = vld [vmem:[%s3 + $0x650] sm:$0xff]
      %v1348 = vld [vmem:[%s3 + $0x658] sm:$0xff]
      %v1349 = vld [vmem:[%s3 + $0x660] sm:$0xff]
      %v1350 = vld [vmem:[%s3 + $0x668] sm:$0xff]
      %v1351 = vld [vmem:[%s3 + $0x670] sm:$0xff]
      %v1352 = vld [vmem:[%s3 + $0x678] sm:$0xff]
      %v1353 = vld [vmem:[%s3 + $0x680] sm:$0xff]
      %v1354 = vld [vmem:[%s3 + $0x688] sm:$0xff]
      %v1355 = vld [vmem:[%s3 + $0x690] sm:$0xff]
      %v1356 = vld [vmem:[%s3 + $0x698] sm:$0xff]
      %v1357 = vld [vmem:[%s3 + $0x6a0] sm:$0xff]
      %v1358 = vld [vmem:[%s3 + $0x6a8] sm:$0xff]
      %v1359 = vld [vmem:[%s3 + $0x6b0] sm:$0xff]
      %v1360 = vld [vmem:[%s3 + $0x6b8] sm:$0xff]
      %v1361 = vld [vmem:[%s3 + $0x6c0] sm:$0xff]
      %v1362 = vld [vmem:[%s3 + $0x6c8] sm:$0xff]
      %v1363 = vld [vmem:[%s3 + $0x6d0] sm:$0xff]
      %v1364 = vld [vmem:[%s3 + $0x6d8] sm:$0xff]
      %v1365 = vld [vmem:[%s3 + $0x6e0] sm:$0xff]
      %v1366 = vld [vmem:[%s3 + $0x6e8] sm:$0xff]
      %v1367 = vld [vmem:[%s3 + $0x6f0] sm:$0xff]
      %v1368 = vld [vmem:[%s3 + $0x6f8] sm:$0xff]
      %v1369 = vld [vmem:[%s3 + $0x700] sm:$0xff]
      %v1370 = vld [vmem:[%s3 + $0x708] sm:$0xff]
      %v1371 = vld [vmem:[%s3 + $0x710] sm:$0xff]
      %v1372 = vld [vmem:[%s3 + $0x718] sm:$0xff]
      %v1373 = vld [vmem:[%s3 + $0x720] sm:$0xff]
      %v1374 = vld [vmem:[%s3 + $0x728] sm:$0xff]
      %v1375 = vld [vmem:[%s3 + $0x730] sm:$0xff]
      %v1376 = vld [vmem:[%s3 + $0x738] sm:$0xff]
      %v1377 = vld [vmem:[%s3 + $0x740] sm:$0xff]
      %v1378 = vld [vmem:[%s3 + $0x748] sm:$0xff]
      %v1379 = vld [vmem:[%s3 + $0x750] sm:$0xff]
      %v1380 = vld [vmem:[%s3 + $0x758] sm:$0xff]
      %v1381 = vld [vmem:[%s3 + $0x760] sm:$0xff]
      %v1382 = vld [vmem:[%s3 + $0x768] sm:$0xff]
      %v1383 = vld [vmem:[%s3 + $0x770] sm:$0xff]
      %v1384 = vld [vmem:[%s3 + $0x778] sm:$0xff]
      %v1385 = vld [vmem:[%s3 + $0x780] sm:$0xff]
      %v1386 = vld [vmem:[%s3 + $0x788] sm:$0xff]
      %v1387 = vld [vmem:[%s3 + $0x790] sm:$0xff]
      %v1388 = vld [vmem:[%s3 + $0x798] sm:$0xff]
      %v1389 = vld [vmem:[%s3 + $0x7a0] sm:$0xff]
      %v1390 = vld [vmem:[%s3 + $0x7a8] sm:$0xff]
      %v1391 = vld [vmem:[%s3 + $0x7b0] sm:$0xff]
      %v1392 = vld [vmem:[%s3 + $0x7b8] sm:$0xff]
      %v1393 = vld [vmem:[%s3 + $0x7c0] sm:$0xff]
      %v1394 = vld [vmem:[%s3 + $0x7c8] sm:$0xff]
      %v1395 = vld [vmem:[%s3 + $0x7d0] sm:$0xff]
      %v1396 = vld [vmem:[%s3 + $0x7d8] sm:$0xff]
      %v1397 = vld [vmem:[%s3 + $0x7e0] sm:$0xff]
      %v1398 = vld [vmem:[%s3 + $0x7e8] sm:$0xff]
      %v1399 = vld [vmem:[%s3 + $0x7f0] sm:$0xff]
      %v1400 = vld [vmem:[%s3 + $0x7f8] sm:$0xff]
      %v1401 = vld [vmem:[%s4] sm:$0x1]
      %v1403 = vlaneseq
      %v1404 = vshrl.u32 %v1403, 7
      %v1405 = vsub.s32 0, %v1404
      %v1406 = vrot.slane %v1401, %v1405
      %1408 = vmatprep.subr.mxu0 0.0
      %1409 = vmatpush1.msra.mxu0 %v1145
      %1410 = vmatprep.subr.mxu0 0.0
      %1411 = vmatpush1.msra.mxu0 %v1146
      %1412 = vmatprep.subr.mxu0 0.0
      %1413 = vmatpush1.msra.mxu0 %v1147
      %1414 = vmatprep.subr.mxu0 0.0
      %1415 = vmatpush1.msra.mxu0 %v1148
      %1416 = vmatprep.subr.mxu0 0.0
      %1417 = vmatpush1.msra.mxu0 %v1149
      %1418 = vmatprep.subr.mxu0 0.0
      %1419 = vmatpush1.msra.mxu0 %v1150
      %1420 = vmatprep.subr.mxu0 0.0
      %1421 = vmatpush1.msra.mxu0 %v1151
      %1422 = vmatprep.subr.mxu0 0.0
      %1423 = vmatpush1.msra.mxu0 %v1152
      %1424 = vmatprep.subr.mxu0 0.0
      %1425 = vmatpush1.msra.mxu0 %v1153
      %1426 = vmatprep.subr.mxu0 0.0
      %1427 = vmatpush1.msra.mxu0 %v1154
      %1428 = vmatprep.subr.mxu0 0.0
      %1429 = vmatpush1.msra.mxu0 %v1155
      %1430 = vmatprep.subr.mxu0 0.0
      %1431 = vmatpush1.msra.mxu0 %v1156
      %1432 = vmatprep.subr.mxu0 0.0
      %1433 = vmatpush1.msra.mxu0 %v1157
      %1434 = vmatprep.subr.mxu0 0.0
      %1435 = vmatpush1.msra.mxu0 %v1158
      %1436 = vmatprep.subr.mxu0 0.0
      %1437 = vmatpush1.msra.mxu0 %v1159
      %1438 = vmatprep.subr.mxu0 0.0
      %1439 = vmatpush1.msra.mxu0 %v1160
      %1440 = vmatprep.subr.mxu0 0.0
      %1441 = vmatpush1.msra.mxu0 %v1161
      %1442 = vmatprep.subr.mxu0 0.0
      %1443 = vmatpush1.msra.mxu0 %v1162
      %1444 = vmatprep.subr.mxu0 0.0
      %1445 = vmatpush1.msra.mxu0 %v1163
      %1446 = vmatprep.subr.mxu0 0.0
      %1447 = vmatpush1.msra.mxu0 %v1164
      %1448 = vmatprep.subr.mxu0 0.0
      %1449 = vmatpush1.msra.mxu0 %v1165
      %1450 = vmatprep.subr.mxu0 0.0
      %1451 = vmatpush1.msra.mxu0 %v1166
      %1452 = vmatprep.subr.mxu0 0.0
      %1453 = vmatpush1.msra.mxu0 %v1167
      %1454 = vmatprep.subr.mxu0 0.0
      %1455 = vmatpush1.msra.mxu0 %v1168
      %1456 = vmatprep.subr.mxu0 0.0
      %1457 = vmatpush1.msra.mxu0 %v1169
      %1458 = vmatprep.subr.mxu0 0.0
      %1459 = vmatpush1.msra.mxu0 %v1170
      %1460 = vmatprep.subr.mxu0 0.0
      %1461 = vmatpush1.msra.mxu0 %v1171
      %1462 = vmatprep.subr.mxu0 0.0
      %1463 = vmatpush1.msra.mxu0 %v1172
      %1464 = vmatprep.subr.mxu0 0.0
      %1465 = vmatpush1.msra.mxu0 %v1173
      %1466 = vmatprep.subr.mxu0 0.0
      %1467 = vmatpush1.msra.mxu0 %v1174
      %1468 = vmatprep.subr.mxu0 0.0
      %1469 = vmatpush1.msra.mxu0 %v1175
      %1470 = vmatprep.subr.mxu0 0.0
      %1471 = vmatpush1.msra.mxu0 %v1176
      %1472 = vmatprep.mubr.f32.mxu0 %v1130
      %1473 = vmatmul.mubr.f32.gmra.mrb[0].mxu0 %v1129
      %v1474 = vpop.f32.mrb[0].mxu0
      %v1475 = vadd.f32 %v1406, %v1474
      %v1476 = vpop.f32.mrb[0].mxu0
      %1477 = vdwg.mxu0
      %1478 = vmatprep.subr.mxu0 0.0
      %1479 = vmatpush1.msra.mxu0 %v1177
      %1480 = vmatprep.subr.mxu0 0.0
      %1481 = vmatpush1.msra.mxu0 %v1178
      %1482 = vmatprep.subr.mxu0 0.0
      %1483 = vmatpush1.msra.mxu0 %v1179
      %1484 = vmatprep.subr.mxu0 0.0
      %1485 = vmatpush1.msra.mxu0 %v1180
      %1486 = vmatprep.subr.mxu0 0.0
      %1487 = vmatpush1.msra.mxu0 %v1181
      %1488 = vmatprep.subr.mxu0 0.0
      %1489 = vmatpush1.msra.mxu0 %v1182
      %1490 = vmatprep.subr.mxu0 0.0
      %1491 = vmatpush1.msra.mxu0 %v1183
      %1492 = vmatprep.subr.mxu0 0.0
      %1493 = vmatpush1.msra.mxu0 %v1184
      %1494 = vmatprep.subr.mxu0 0.0
      %1495 = vmatpush1.msra.mxu0 %v1185
      %1496 = vmatprep.subr.mxu0 0.0
      %1497 = vmatpush1.msra.mxu0 %v1186
      %1498 = vmatprep.subr.mxu0 0.0
      %1499 = vmatpush1.msra.mxu0 %v1187
      %1500 = vmatprep.subr.mxu0 0.0
      %1501 = vmatpush1.msra.mxu0 %v1188
      %1502 = vmatprep.subr.mxu0 0.0
      %1503 = vmatpush1.msra.mxu0 %v1189
      %1504 = vmatprep.subr.mxu0 0.0
      %1505 = vmatpush1.msra.mxu0 %v1190
      %1506 = vmatprep.subr.mxu0 0.0
      %1507 = vmatpush1.msra.mxu0 %v1191
      %1508 = vmatprep.subr.mxu0 0.0
      %1509 = vmatpush1.msra.mxu0 %v1192
      %1510 = vmatprep.subr.mxu0 0.0
      %1511 = vmatpush1.msra.mxu0 %v1193
      %1512 = vmatprep.subr.mxu0 0.0
      %1513 = vmatpush1.msra.mxu0 %v1194
      %1514 = vmatprep.subr.mxu0 0.0
      %1515 = vmatpush1.msra.mxu0 %v1195
      %1516 = vmatprep.subr.mxu0 0.0
      %1517 = vmatpush1.msra.mxu0 %v1196
      %1518 = vmatprep.subr.mxu0 0.0
      %1519 = vmatpush1.msra.mxu0 %v1197
      %1520 = vmatprep.subr.mxu0 0.0
      %1521 = vmatpush1.msra.mxu0 %v1198
      %1522 = vmatprep.subr.mxu0 0.0
      %1523 = vmatpush1.msra.mxu0 %v1199
      %1524 = vmatprep.subr.mxu0 0.0
      %1525 = vmatpush1.msra.mxu0 %v1200
      %1526 = vmatprep.subr.mxu0 0.0
      %1527 = vmatpush1.msra.mxu0 %v1201
      %1528 = vmatprep.subr.mxu0 0.0
      %1529 = vmatpush1.msra.mxu0 %v1202
      %1530 = vmatprep.subr.mxu0 0.0
      %1531 = vmatpush1.msra.mxu0 %v1203
      %1532 = vmatprep.subr.mxu0 0.0
      %1533 = vmatpush1.msra.mxu0 %v1204
      %1534 = vmatprep.subr.mxu0 0.0
      %1535 = vmatpush1.msra.mxu0 %v1205
      %1536 = vmatprep.subr.mxu0 0.0
      %1537 = vmatpush1.msra.mxu0 %v1206
      %1538 = vmatprep.subr.mxu0 0.0
      %1539 = vmatpush1.msra.mxu0 %v1207
      %1540 = vmatprep.subr.mxu0 0.0
      %1541 = vmatpush1.msra.mxu0 %v1208
      %1542 = vmatprep.mubr.f32.mxu0 %v1132
      %1543 = vmatmul.mubr.f32.gmra.mrb[0].mxu0 %v1131
      %v1544 = vpop.f32.mrb[0].mxu0
      %v1545 = vadd.f32 %v1475, %v1544
      %v1546 = vpop.f32.mrb[0].mxu0
      %1547 = vdwg.mxu0
      %1548 = vmatprep.subr.mxu0 0.0
      %1549 = vmatpush1.msra.mxu0 %v1209
      %1550 = vmatprep.subr.mxu0 0.0
      %1551 = vmatpush1.msra.mxu0 %v1210
      %1552 = vmatprep.subr.mxu0 0.0
      %1553 = vmatpush1.msra.mxu0 %v1211
      %1554 = vmatprep.subr.mxu0 0.0
      %1555 = vmatpush1.msra.mxu0 %v1212
      %1556 = vmatprep.subr.mxu0 0.0
      %1557 = vmatpush1.msra.mxu0 %v1213
      %1558 = vmatprep.subr.mxu0 0.0
      %1559 = vmatpush1.msra.mxu0 %v1214
      %1560 = vmatprep.subr.mxu0 0.0
      %1561 = vmatpush1.msra.mxu0 %v1215
      %1562 = vmatprep.subr.mxu0 0.0
      %1563 = vmatpush1.msra.mxu0 %v1216
      %1564 = vmatprep.subr.mxu0 0.0
      %1565 = vmatpush1.msra.mxu0 %v1217
      %1566 = vmatprep.subr.mxu0 0.0
      %1567 = vmatpush1.msra.mxu0 %v1218
      %1568 = vmatprep.subr.mxu0 0.0
      %1569 = vmatpush1.msra.mxu0 %v1219
      %1570 = vmatprep.subr.mxu0 0.0
      %1571 = vmatpush1.msra.mxu0 %v1220
      %1572 = vmatprep.subr.mxu0 0.0
      %1573 = vmatpush1.msra.mxu0 %v1221
      %1574 = vmatprep.subr.mxu0 0.0
      %1575 = vmatpush1.msra.mxu0 %v1222
      %1576 = vmatprep.subr.mxu0 0.0
      %1577 = vmatpush1.msra.mxu0 %v1223
      %1578 = vmatprep.subr.mxu0 0.0
      %1579 = vmatpush1.msra.mxu0 %v1224
      %1580 = vmatprep.subr.mxu0 0.0
      %1581 = vmatpush1.msra.mxu0 %v1225
      %1582 = vmatprep.subr.mxu0 0.0
      %1583 = vmatpush1.msra.mxu0 %v1226
      %1584 = vmatprep.subr.mxu0 0.0
      %1585 = vmatpush1.msra.mxu0 %v1227
      %1586 = vmatprep.subr.mxu0 0.0
      %1587 = vmatpush1.msra.mxu0 %v1228
      %1588 = vmatprep.subr.mxu0 0.0
      %1589 = vmatpush1.msra.mxu0 %v1229
      %1590 = vmatprep.subr.mxu0 0.0
      %1591 = vmatpush1.msra.mxu0 %v1230
      %1592 = vmatprep.subr.mxu0 0.0
      %1593 = vmatpush1.msra.mxu0 %v1231
      %1594 = vmatprep.subr.mxu0 0.0
      %1595 = vmatpush1.msra.mxu0 %v1232
      %1596 = vmatprep.subr.mxu0 0.0
      %1597 = vmatpush1.msra.mxu0 %v1233
      %1598 = vmatprep.subr.mxu0 0.0
      %1599 = vmatpush1.msra.mxu0 %v1234
      %1600 = vmatprep.subr.mxu0 0.0
      %1601 = vmatpush1.msra.mxu0 %v1235
      %1602 = vmatprep.subr.mxu0 0.0
      %1603 = vmatpush1.msra.mxu0 %v1236
      %1604 = vmatprep.subr.mxu0 0.0
      %1605 = vmatpush1.msra.mxu0 %v1237
      %1606 = vmatprep.subr.mxu0 0.0
      %1607 = vmatpush1.msra.mxu0 %v1238
      %1608 = vmatprep.subr.mxu0 0.0
      %1609 = vmatpush1.msra.mxu0 %v1239
      %1610 = vmatprep.subr.mxu0 0.0
      %1611 = vmatpush1.msra.mxu0 %v1240
      %1612 = vmatprep.mubr.f32.mxu0 %v1134
      %1613 = vmatmul.mubr.f32.gmra.mrb[0].mxu0 %v1133
      %v1614 = vpop.f32.mrb[0].mxu0
      %v1615 = vadd.f32 %v1545, %v1614
      %v1616 = vpop.f32.mrb[0].mxu0
      %1617 = vdwg.mxu0
      %1618 = vmatprep.subr.mxu0 0.0
      %1619 = vmatpush1.msra.mxu0 %v1241
      %1620 = vmatprep.subr.mxu0 0.0
      %1621 = vmatpush1.msra.mxu0 %v1242
      %1622 = vmatprep.subr.mxu0 0.0
      %1623 = vmatpush1.msra.mxu0 %v1243
      %1624 = vmatprep.subr.mxu0 0.0
      %1625 = vmatpush1.msra.mxu0 %v1244
      %1626 = vmatprep.subr.mxu0 0.0
      %1627 = vmatpush1.msra.mxu0 %v1245
      %1628 = vmatprep.subr.mxu0 0.0
      %1629 = vmatpush1.msra.mxu0 %v1246
      %1630 = vmatprep.subr.mxu0 0.0
      %1631 = vmatpush1.msra.mxu0 %v1247
      %1632 = vmatprep.subr.mxu0 0.0
      %1633 = vmatpush1.msra.mxu0 %v1248
      %1634 = vmatprep.subr.mxu0 0.0
      %1635 = vmatpush1.msra.mxu0 %v1249
      %1636 = vmatprep.subr.mxu0 0.0
      %1637 = vmatpush1.msra.mxu0 %v1250
      %1638 = vmatprep.subr.mxu0 0.0
      %1639 = vmatpush1.msra.mxu0 %v1251
      %1640 = vmatprep.subr.mxu0 0.0
      %1641 = vmatpush1.msra.mxu0 %v1252
      %1642 = vmatprep.subr.mxu0 0.0
      %1643 = vmatpush1.msra.mxu0 %v1253
      %1644 = vmatprep.subr.mxu0 0.0
      %1645 = vmatpush1.msra.mxu0 %v1254
      %1646 = vmatprep.subr.mxu0 0.0
      %1647 = vmatpush1.msra.mxu0 %v1255
      %1648 = vmatprep.subr.mxu0 0.0
      %1649 = vmatpush1.msra.mxu0 %v1256
      %1650 = vmatprep.subr.mxu0 0.0
      %1651 = vmatpush1.msra.mxu0 %v1257
      %1652 = vmatprep.subr.mxu0 0.0
      %1653 = vmatpush1.msra.mxu0 %v1258
      %1654 = vmatprep.subr.mxu0 0.0
      %1655 = vmatpush1.msra.mxu0 %v1259
      %1656 = vmatprep.subr.mxu0 0.0
      %1657 = vmatpush1.msra.mxu0 %v1260
      %1658 = vmatprep.subr.mxu0 0.0
      %1659 = vmatpush1.msra.mxu0 %v1261
      %1660 = vmatprep.subr.mxu0 0.0
      %1661 = vmatpush1.msra.mxu0 %v1262
      %1662 = vmatprep.subr.mxu0 0.0
      %1663 = vmatpush1.msra.mxu0 %v1263
      %1664 = vmatprep.subr.mxu0 0.0
      %1665 = vmatpush1.msra.mxu0 %v1264
      %1666 = vmatprep.subr.mxu0 0.0
      %1667 = vmatpush1.msra.mxu0 %v1265
      %1668 = vmatprep.subr.mxu0 0.0
      %1669 = vmatpush1.msra.mxu0 %v1266
      %1670 = vmatprep.subr.mxu0 0.0
      %1671 = vmatpush1.msra.mxu0 %v1267
      %1672 = vmatprep.subr.mxu0 0.0
      %1673 = vmatpush1.msra.mxu0 %v1268
      %1674 = vmatprep.subr.mxu0 0.0
      %1675 = vmatpush1.msra.mxu0 %v1269
      %1676 = vmatprep.subr.mxu0 0.0
      %1677 = vmatpush1.msra.mxu0 %v1270
      %1678 = vmatprep.subr.mxu0 0.0
      %1679 = vmatpush1.msra.mxu0 %v1271
      %1680 = vmatprep.subr.mxu0 0.0
      %1681 = vmatpush1.msra.mxu0 %v1272
      %1682 = vmatprep.mubr.f32.mxu0 %v1136
      %1683 = vmatmul.mubr.f32.gmra.mrb[0].mxu0 %v1135
      %v1684 = vpop.f32.mrb[0].mxu0
      %v1685 = vadd.f32 %v1615, %v1684
      %v1686 = vpop.f32.mrb[0].mxu0
      %1687 = vdwg.mxu0
      %1688 = vmatprep.subr.mxu0 0.0
      %1689 = vmatpush1.msra.mxu0 %v1273
      %1690 = vmatprep.subr.mxu0 0.0
      %1691 = vmatpush1.msra.mxu0 %v1274
      %1692 = vmatprep.subr.mxu0 0.0
      %1693 = vmatpush1.msra.mxu0 %v1275
      %1694 = vmatprep.subr.mxu0 0.0
      %1695 = vmatpush1.msra.mxu0 %v1276
      %1696 = vmatprep.subr.mxu0 0.0
      %1697 = vmatpush1.msra.mxu0 %v1277
      %1698 = vmatprep.subr.mxu0 0.0
      %1699 = vmatpush1.msra.mxu0 %v1278
      %1700 = vmatprep.subr.mxu0 0.0
      %1701 = vmatpush1.msra.mxu0 %v1279
      %1702 = vmatprep.subr.mxu0 0.0
      %1703 = vmatpush1.msra.mxu0 %v1280
      %1704 = vmatprep.subr.mxu0 0.0
      %1705 = vmatpush1.msra.mxu0 %v1281
      %1706 = vmatprep.subr.mxu0 0.0
      %1707 = vmatpush1.msra.mxu0 %v1282
      %1708 = vmatprep.subr.mxu0 0.0
      %1709 = vmatpush1.msra.mxu0 %v1283
      %1710 = vmatprep.subr.mxu0 0.0
      %1711 = vmatpush1.msra.mxu0 %v1284
      %1712 = vmatprep.subr.mxu0 0.0
      %1713 = vmatpush1.msra.mxu0 %v1285
      %1714 = vmatprep.subr.mxu0 0.0
      %1715 = vmatpush1.msra.mxu0 %v1286
      %1716 = vmatprep.subr.mxu0 0.0
      %1717 = vmatpush1.msra.mxu0 %v1287
      %1718 = vmatprep.subr.mxu0 0.0
      %1719 = vmatpush1.msra.mxu0 %v1288
      %1720 = vmatprep.subr.mxu0 0.0
      %1721 = vmatpush1.msra.mxu0 %v1289
      %1722 = vmatprep.subr.mxu0 0.0
      %1723 = vmatpush1.msra.mxu0 %v1290
      %1724 = vmatprep.subr.mxu0 0.0
      %1725 = vmatpush1.msra.mxu0 %v1291
      %1726 = vmatprep.subr.mxu0 0.0
      %1727 = vmatpush1.msra.mxu0 %v1292
      %1728 = vmatprep.subr.mxu0 0.0
      %1729 = vmatpush1.msra.mxu0 %v1293
      %1730 = vmatprep.subr.mxu0 0.0
      %1731 = vmatpush1.msra.mxu0 %v1294
      %1732 = vmatprep.subr.mxu0 0.0
      %1733 = vmatpush1.msra.mxu0 %v1295
      %1734 = vmatprep.subr.mxu0 0.0
      %1735 = vmatpush1.msra.mxu0 %v1296
      %1736 = vmatprep.subr.mxu0 0.0
      %1737 = vmatpush1.msra.mxu0 %v1297
      %1738 = vmatprep.subr.mxu0 0.0
      %1739 = vmatpush1.msra.mxu0 %v1298
      %1740 = vmatprep.subr.mxu0 0.0
      %1741 = vmatpush1.msra.mxu0 %v1299
      %1742 = vmatprep.subr.mxu0 0.0
      %1743 = vmatpush1.msra.mxu0 %v1300
      %1744 = vmatprep.subr.mxu0 0.0
      %1745 = vmatpush1.msra.mxu0 %v1301
      %1746 = vmatprep.subr.mxu0 0.0
      %1747 = vmatpush1.msra.mxu0 %v1302
      %1748 = vmatprep.subr.mxu0 0.0
      %1749 = vmatpush1.msra.mxu0 %v1303
      %1750 = vmatprep.subr.mxu0 0.0
      %1751 = vmatpush1.msra.mxu0 %v1304
      %1752 = vmatprep.mubr.f32.mxu0 %v1138
      %1753 = vmatmul.mubr.f32.gmra.mrb[0].mxu0 %v1137
      %v1754 = vpop.f32.mrb[0].mxu0
      %v1755 = vadd.f32 %v1685, %v1754
      %v1756 = vpop.f32.mrb[0].mxu0
      %1757 = vdwg.mxu0
      %1758 = vmatprep.subr.mxu0 0.0
      %1759 = vmatpush1.msra.mxu0 %v1305
      %1760 = vmatprep.subr.mxu0 0.0
      %1761 = vmatpush1.msra.mxu0 %v1306
      %1762 = vmatprep.subr.mxu0 0.0
      %1763 = vmatpush1.msra.mxu0 %v1307
      %1764 = vmatprep.subr.mxu0 0.0
      %1765 = vmatpush1.msra.mxu0 %v1308
      %1766 = vmatprep.subr.mxu0 0.0
      %1767 = vmatpush1.msra.mxu0 %v1309
      %1768 = vmatprep.subr.mxu0 0.0
      %1769 = vmatpush1.msra.mxu0 %v1310
      %1770 = vmatprep.subr.mxu0 0.0
      %1771 = vmatpush1.msra.mxu0 %v1311
      %1772 = vmatprep.subr.mxu0 0.0
      %1773 = vmatpush1.msra.mxu0 %v1312
      %1774 = vmatprep.subr.mxu0 0.0
      %1775 = vmatpush1.msra.mxu0 %v1313
      %1776 = vmatprep.subr.mxu0 0.0
      %1777 = vmatpush1.msra.mxu0 %v1314
      %1778 = vmatprep.subr.mxu0 0.0
      %1779 = vmatpush1.msra.mxu0 %v1315
      %1780 = vmatprep.subr.mxu0 0.0
      %1781 = vmatpush1.msra.mxu0 %v1316
      %1782 = vmatprep.subr.mxu0 0.0
      %1783 = vmatpush1.msra.mxu0 %v1317
      %1784 = vmatprep.subr.mxu0 0.0
      %1785 = vmatpush1.msra.mxu0 %v1318
      %1786 = vmatprep.subr.mxu0 0.0
      %1787 = vmatpush1.msra.mxu0 %v1319
      %1788 = vmatprep.subr.mxu0 0.0
      %1789 = vmatpush1.msra.mxu0 %v1320
      %1790 = vmatprep.subr.mxu0 0.0
      %1791 = vmatpush1.msra.mxu0 %v1321
      %1792 = vmatprep.subr.mxu0 0.0
      %1793 = vmatpush1.msra.mxu0 %v1322
      %1794 = vmatprep.subr.mxu0 0.0
      %1795 = vmatpush1.msra.mxu0 %v1323
      %1796 = vmatprep.subr.mxu0 0.0
      %1797 = vmatpush1.msra.mxu0 %v1324
      %1798 = vmatprep.subr.mxu0 0.0
      %1799 = vmatpush1.msra.mxu0 %v1325
      %1800 = vmatprep.subr.mxu0 0.0
      %1801 = vmatpush1.msra.mxu0 %v1326
      %1802 = vmatprep.subr.mxu0 0.0
      %1803 = vmatpush1.msra.mxu0 %v1327
      %1804 = vmatprep.subr.mxu0 0.0
      %1805 = vmatpush1.msra.mxu0 %v1328
      %1806 = vmatprep.subr.mxu0 0.0
      %1807 = vmatpush1.msra.mxu0 %v1329
      %1808 = vmatprep.subr.mxu0 0.0
      %1809 = vmatpush1.msra.mxu0 %v1330
      %1810 = vmatprep.subr.mxu0 0.0
      %1811 = vmatpush1.msra.mxu0 %v1331
      %1812 = vmatprep.subr.mxu0 0.0
      %1813 = vmatpush1.msra.mxu0 %v1332
      %1814 = vmatprep.subr.mxu0 0.0
      %1815 = vmatpush1.msra.mxu0 %v1333
      %1816 = vmatprep.subr.mxu0 0.0
      %1817 = vmatpush1.msra.mxu0 %v1334
      %1818 = vmatprep.subr.mxu0 0.0
      %1819 = vmatpush1.msra.mxu0 %v1335
      %1820 = vmatprep.subr.mxu0 0.0
      %1821 = vmatpush1.msra.mxu0 %v1336
      %1822 = vmatprep.mubr.f32.mxu0 %v1140
      %1823 = vmatmul.mubr.f32.gmra.mrb[0].mxu0 %v1139
      %v1824 = vpop.f32.mrb[0].mxu0
      %v1825 = vadd.f32 %v1755, %v1824
      %v1826 = vpop.f32.mrb[0].mxu0
      %1827 = vdwg.mxu0
      %1828 = vmatprep.subr.mxu0 0.0
      %1829 = vmatpush1.msra.mxu0 %v1337
      %1830 = vmatprep.subr.mxu0 0.0
      %1831 = vmatpush1.msra.mxu0 %v1338
      %1832 = vmatprep.subr.mxu0 0.0
      %1833 = vmatpush1.msra.mxu0 %v1339
      %1834 = vmatprep.subr.mxu0 0.0
      %1835 = vmatpush1.msra.mxu0 %v1340
      %1836 = vmatprep.subr.mxu0 0.0
      %1837 = vmatpush1.msra.mxu0 %v1341
      %1838 = vmatprep.subr.mxu0 0.0
      %1839 = vmatpush1.msra.mxu0 %v1342
      %1840 = vmatprep.subr.mxu0 0.0
      %1841 = vmatpush1.msra.mxu0 %v1343
      %1842 = vmatprep.subr.mxu0 0.0
      %1843 = vmatpush1.msra.mxu0 %v1344
      %1844 = vmatprep.subr.mxu0 0.0
      %1845 = vmatpush1.msra.mxu0 %v1345
      %1846 = vmatprep.subr.mxu0 0.0
      %1847 = vmatpush1.msra.mxu0 %v1346
      %1848 = vmatprep.subr.mxu0 0.0
      %1849 = vmatpush1.msra.mxu0 %v1347
      %1850 = vmatprep.subr.mxu0 0.0
      %1851 = vmatpush1.msra.mxu0 %v1348
      %1852 = vmatprep.subr.mxu0 0.0
      %1853 = vmatpush1.msra.mxu0 %v1349
      %1854 = vmatprep.subr.mxu0 0.0
      %1855 = vmatpush1.msra.mxu0 %v1350
      %1856 = vmatprep.subr.mxu0 0.0
      %1857 = vmatpush1.msra.mxu0 %v1351
      %1858 = vmatprep.subr.mxu0 0.0
      %1859 = vmatpush1.msra.mxu0 %v1352
      %1860 = vmatprep.subr.mxu0 0.0
      %1861 = vmatpush1.msra.mxu0 %v1353
      %1862 = vmatprep.subr.mxu0 0.0
      %1863 = vmatpush1.msra.mxu0 %v1354
      %1864 = vmatprep.subr.mxu0 0.0
      %1865 = vmatpush1.msra.mxu0 %v1355
      %1866 = vmatprep.subr.mxu0 0.0
      %1867 = vmatpush1.msra.mxu0 %v1356
      %1868 = vmatprep.subr.mxu0 0.0
      %1869 = vmatpush1.msra.mxu0 %v1357
      %1870 = vmatprep.subr.mxu0 0.0
      %1871 = vmatpush1.msra.mxu0 %v1358
      %1872 = vmatprep.subr.mxu0 0.0
      %1873 = vmatpush1.msra.mxu0 %v1359
      %1874 = vmatprep.subr.mxu0 0.0
      %1875 = vmatpush1.msra.mxu0 %v1360
      %1876 = vmatprep.subr.mxu0 0.0
      %1877 = vmatpush1.msra.mxu0 %v1361
      %1878 = vmatprep.subr.mxu0 0.0
      %1879 = vmatpush1.msra.mxu0 %v1362
      %1880 = vmatprep.subr.mxu0 0.0
      %1881 = vmatpush1.msra.mxu0 %v1363
      %1882 = vmatprep.subr.mxu0 0.0
      %1883 = vmatpush1.msra.mxu0 %v1364
      %1884 = vmatprep.subr.mxu0 0.0
      %1885 = vmatpush1.msra.mxu0 %v1365
      %1886 = vmatprep.subr.mxu0 0.0
      %1887 = vmatpush1.msra.mxu0 %v1366
      %1888 = vmatprep.subr.mxu0 0.0
      %1889 = vmatpush1.msra.mxu0 %v1367
      %1890 = vmatprep.subr.mxu0 0.0
      %1891 = vmatpush1.msra.mxu0 %v1368
      %1892 = vmatprep.mubr.f32.mxu0 %v1142
      %1893 = vmatmul.mubr.f32.gmra.mrb[0].mxu0 %v1141
      %v1894 = vpop.f32.mrb[0].mxu0
      %v1895 = vadd.f32 %v1825, %v1894
      %v1896 = vpop.f32.mrb[0].mxu0
      %1897 = vdwg.mxu0
      %1898 = vmatprep.subr.mxu0 0.0
      %1899 = vmatpush1.msra.mxu0 %v1369
      %1900 = vmatprep.subr.mxu0 0.0
      %1901 = vmatpush1.msra.mxu0 %v1370
      %1902 = vmatprep.subr.mxu0 0.0
      %1903 = vmatpush1.msra.mxu0 %v1371
      %1904 = vmatprep.subr.mxu0 0.0
      %1905 = vmatpush1.msra.mxu0 %v1372
      %1906 = vmatprep.subr.mxu0 0.0
      %1907 = vmatpush1.msra.mxu0 %v1373
      %1908 = vmatprep.subr.mxu0 0.0
      %1909 = vmatpush1.msra.mxu0 %v1374
      %1910 = vmatprep.subr.mxu0 0.0
      %1911 = vmatpush1.msra.mxu0 %v1375
      %1912 = vmatprep.subr.mxu0 0.0
      %1913 = vmatpush1.msra.mxu0 %v1376
      %1914 = vmatprep.subr.mxu0 0.0
      %1915 = vmatpush1.msra.mxu0 %v1377
      %1916 = vmatprep.subr.mxu0 0.0
      %1917 = vmatpush1.msra.mxu0 %v1378
      %1918 = vmatprep.subr.mxu0 0.0
      %1919 = vmatpush1.msra.mxu0 %v1379
      %1920 = vmatprep.subr.mxu0 0.0
      %1921 = vmatpush1.msra.mxu0 %v1380
      %1922 = vmatprep.subr.mxu0 0.0
      %1923 = vmatpush1.msra.mxu0 %v1381
      %1924 = vmatprep.subr.mxu0 0.0
      %1925 = vmatpush1.msra.mxu0 %v1382
      %1926 = vmatprep.subr.mxu0 0.0
      %1927 = vmatpush1.msra.mxu0 %v1383
      %1928 = vmatprep.subr.mxu0 0.0
      %1929 = vmatpush1.msra.mxu0 %v1384
      %1930 = vmatprep.subr.mxu0 0.0
      %1931 = vmatpush1.msra.mxu0 %v1385
      %1932 = vmatprep.subr.mxu0 0.0
      %1933 = vmatpush1.msra.mxu0 %v1386
      %1934 = vmatprep.subr.mxu0 0.0
      %1935 = vmatpush1.msra.mxu0 %v1387
      %1936 = vmatprep.subr.mxu0 0.0
      %1937 = vmatpush1.msra.mxu0 %v1388
      %1938 = vmatprep.subr.mxu0 0.0
      %1939 = vmatpush1.msra.mxu0 %v1389
      %1940 = vmatprep.subr.mxu0 0.0
      %1941 = vmatpush1.msra.mxu0 %v1390
      %1942 = vmatprep.subr.mxu0 0.0
      %1943 = vmatpush1.msra.mxu0 %v1391
      %1944 = vmatprep.subr.mxu0 0.0
      %1945 = vmatpush1.msra.mxu0 %v1392
      %1946 = vmatprep.subr.mxu0 0.0
      %1947 = vmatpush1.msra.mxu0 %v1393
      %1948 = vmatprep.subr.mxu0 0.0
      %1949 = vmatpush1.msra.mxu0 %v1394
      %1950 = vmatprep.subr.mxu0 0.0
      %1951 = vmatpush1.msra.mxu0 %v1395
      %1952 = vmatprep.subr.mxu0 0.0
      %1953 = vmatpush1.msra.mxu0 %v1396
      %1954 = vmatprep.subr.mxu0 0.0
      %1955 = vmatpush1.msra.mxu0 %v1397
      %1956 = vmatprep.subr.mxu0 0.0
      %1957 = vmatpush1.msra.mxu0 %v1398
      %1958 = vmatprep.subr.mxu0 0.0
      %1959 = vmatpush1.msra.mxu0 %v1399
      %1960 = vmatprep.subr.mxu0 0.0
      %1961 = vmatpush1.msra.mxu0 %v1400
      %1962 = vmatprep.mubr.f32.mxu0 %v1144
      %1963 = vmatmul.mubr.f32.gmra.mrb[0].mxu0 %v1143
      %v1964 = vpop.f32.mrb[0].mxu0
      %v1965 = vadd.f32 %v1895, %v1964
      %v1966 = vpop.f32.mrb[0].mxu0
      %1967 = vdwg.mxu0
      %1968 = vst [vmem:[%s219] sm:$0xff] %v1965
      %p1969 = scmp.lt.s32.totalorder %s16, 1
      %s1970 = scalar_select %p1969, %s16, 1
      %s1971 = smul.addr %s1970, 8
      %s1972 = scalar_lea.vmem %s5, %s1971
      // Predicated region
      $region41: #{point_wise_feed_forward.1} parent=39 // pred_check
        %p1973 = pneg %p144
      $region42: #{point_wise_feed_forward.1} parent=39 // pred_check_branch
        %1975 = sbr.rel (%p1973) target = $region44
      $region43: #{point_wise_feed_forward.1} parent=39 // pred_region
        _
      $region44: #{point_wise_feed_forward.1} parent=39 // pred_fallthru
        _
    $region40: #{point_wise_feed_forward.1} parent=5 // pred_fallthru
      _
    %p1976 = scmp.le.s32.totalorder 2, %s11
    // Predicated region
    $region45: #{point_wise_feed_forward.1} parent=5 // pred_check
      %p1977 = pneg %p1976
    $region46: #{point_wise_feed_forward.1} parent=5 // pred_check_branch
      %1979 = sbr.rel (%p1977) target = $region48
    $region47: #{point_wise_feed_forward.1} parent=5 // pred_region
      %s1980 = ssub.s32 %s11, 2
      // Predicated region
      $region49: #{point_wise_feed_forward.1} parent=47 // pred_check
        %p1981 = pneg %p150
      $region50: #{point_wise_feed_forward.1} parent=47 // pred_check_branch
        %1983 = sbr.rel (%p1981) target = $region52
      $region51: #{point_wise_feed_forward.1} parent=47 // pred_region
        %p1984 = scmp.lt.s32.totalorder %s17, 1
        %s1985 = scalar_select %p1984, %s17, 1
        %s1986 = smul.addr %s1985, 8
        %s1987 = scalar_lea.vmem %s5, %s1986
      $region52: #{point_wise_feed_forward.1} parent=47 // pred_fallthru
        _
    $region48: #{point_wise_feed_forward.1} parent=5 // pred_fallthru
      _
  $region6: #{point_wise_feed_forward.1} parent=0 // loop_footer
    %s15 = sadd.s32 1, %s11
  $region7: #{point_wise_feed_forward.1} parent=0 // loop_footer_branch
    %10 = sbr.rel target = $region3
  $region8: #{point_wise_feed_forward.1} parent=0 // loop_exit
    _

</llo_original>
